<compile_context>
chip_gen: v7x
topology: tpu7x:2x2x1
jax: 0.10.0
libtpu: 0.0.40
codegen_flags: <defaults>
</compile_context>

<pallas_src>
import jax
import jax.numpy as jnp
from jax.experimental import pallas as pl
from jax.experimental.pallas import tpu as pltpu


def _r8(v):
    return ((v + 7) // 8) * 8


def _make_kernel(*, N, F_in, heads, hidden, num_classes, HN, HC, OUTW,
                 o_exp, o_bias, o_eye, o_blk, o_w1, o_w2, neg_slope=0.2):
    H = heads
    C2 = num_classes

    def kernel(x_ref, g_ref, c_ref, o_ref):
        f32 = jnp.float32
        x = x_ref[0]                                   # (N, F_in)
        adj_slab = g_ref[0, :, :HN]                    # (N, H*N) adjacency tiled per head
        adjm = g_ref[0, :, :N]                         # (N, N)   adjacency (head-0 block)
        ewm = g_ref[0, :, HN:HN + N]                   # (N, N)   edge weights (0 off-edge, diag 1)

        expand_n = c_ref[o_exp:o_exp + H, :HN]         # (H, H*N) per-head lane broadcast
        b1 = c_ref[o_bias:o_bias + 1, :HC]             # (1, HC)
        b2 = c_ref[o_bias + 1:o_bias + 2, :OUTW]       # (1, OUTW) (zeros past C2)
        eye_t = c_ref[o_eye:o_eye + N, :HN]            # (N, H*N) tiled identity
        blkmask = c_ref[o_blk:o_blk + HN, :HC]         # (H*N, HC) block-diagonal mask
        sum_n = c_ref[o_blk:o_blk + HN, HC:HC + H]     # (H*N, H)  per-head lane sum
        w1 = c_ref[o_w1:o_w1 + F_in, :HC + 2 * H]      # (F_in, HC+2H) = [W1 | W1@Asrc | W1@Adst]
        w2 = c_ref[o_w2:o_w2 + HC, :OUTW]              # (HC, OUTW)    = [W2 | W2 a_src | W2 a_dst | 0]

        # ---------------- layer 1: GATConv(heads, concat=True) + bias + ELU ----------------
        h_ext = jnp.dot(x, w1, preferred_element_type=f32)                 # (N, HC+2H)
        h = h_ext[:, :HC]                                                  # per-head features
        e_src = h_ext[:, HC:HC + H]                                        # (N, H): a_src . h_j
        e_dst = h_ext[:, HC + H:HC + 2 * H]                                # (N, H): a_dst . h_i

        # Lane-packed logits slab: block hd of N lanes holds e_dst[i,hd] + e_src[j,hd].
        dst_slab = jnp.dot(e_dst, expand_n, preferred_element_type=f32)    # (N, HN)
        src_row = jnp.sum(jnp.dot(e_src, expand_n, preferred_element_type=f32) * eye_t,
                          axis=0, keepdims=True)                           # (1, HN)
        logits = dst_slab + src_row
        logits = jnp.where(logits > 0, logits, neg_slope * logits)         # LeakyReLU

        # Per-head softmax over neighbours, shifted by a single global row max (any shift
        # >= each head's max is exact; off-edge terms are zeroed by adj_slab after exp).
        # NOTE: switch back to per-head maxes if per-head logit scales could differ by >~80.
        m = jnp.max(logits, axis=1, keepdims=True)                         # (N, 1)
        p = jnp.exp(logits - m) * adj_slab                                 # (N, HN)
        denom = jnp.dot(p, sum_n, preferred_element_type=f32)              # (N, H)
        recip = pl.reciprocal(denom)                                       # exact (approx=False)
        p = p * jnp.dot(recip, expand_n, preferred_element_type=f32)       # normalised attention

        # Block-diagonal aggregation for all heads in ONE (N,HN)@(HN,HC) matmul.
        hh = jnp.concatenate([h] * H, axis=0) * blkmask                    # (HN, HC)
        x1 = jnp.dot(p, hh, preferred_element_type=f32) + b1               # (N, HC)
        x1 = jnp.where(x1 > 0, x1, jnp.exp(x1) - 1.0)                      # ELU

        # ---------------- layer 2: GATConv(1 head, concat=False), edge-weighted ----------------
        h2e = jnp.dot(x1, w2, preferred_element_type=f32)                  # (N, OUTW)
        e_src2 = h2e[:, C2:C2 + 1]                                         # (N, 1)
        e_dst2 = h2e[:, C2 + 1:C2 + 2]                                     # (N, 1)
        src2 = jnp.sum(e_src2 * eye_t[:, :N], axis=0, keepdims=True)       # (1, N) (no transpose)
        lg2 = e_dst2 + src2                                                # (N, N)
        lg2 = jnp.where(lg2 > 0, lg2, neg_slope * lg2)                     # LeakyReLU
        m2 = jnp.max(lg2, axis=1, keepdims=True)
        p2 = jnp.exp(lg2 - m2)
        denom2 = jnp.sum(p2 * adjm, axis=1, keepdims=True)                 # unweighted softmax denom
        # edge_weight scales the post-softmax attention (no renormalisation); ewm is 0 off-edge.
        o2 = jnp.dot(p2 * ewm, h2e, preferred_element_type=f32)            # (N, OUTW)
        o2 = o2 * pl.reciprocal(denom2) + b2
        o_ref[0] = o2                                                      # lane-dense store

    return kernel


def _pack_params(params, *, F_in, N, heads, hidden, num_classes):
    """Packs all weights (attention vectors folded in), biases and constant selection
    matrices into a single (R, W) f32 array fetched once by the kernel."""
    H, HC, HN, C2 = heads, heads * hidden, heads * N, num_classes
    OUTW = max(128, _r8(C2 + 2))                       # lane-dense padded output width
    W = max(HN, OUTW, HC + 2 * H, HC + H)

    o_exp = 0
    o_bias = _r8(o_exp + H)
    o_eye = _r8(o_bias + 2)
    o_blk = _r8(o_eye + N)
    o_w1 = _r8(o_blk + HN)
    o_w2 = _r8(o_w1 + F_in)
    R = _r8(o_w2 + HC)

    eye_h = jnp.eye(H, dtype=jnp.float32)
    expand_n = jnp.repeat(eye_h, N, axis=1)                                  # (H, HN)
    eye_tile = jnp.tile(jnp.eye(N, dtype=jnp.float32), (1, H))               # (N, HN)
    blkmask = jnp.kron(eye_h, jnp.ones((N, hidden), jnp.float32))            # (HN, HC)

    # conv1: fold per-head attention vectors into the projection (x @ [W1 | W1@A1]).
    A1 = jnp.zeros((HC, 2 * H), jnp.float32)
    for hd in range(H):
        A1 = A1.at[hd * hidden:(hd + 1) * hidden, hd].set(params['asrc1'][hd])
        A1 = A1.at[hd * hidden:(hd + 1) * hidden, H + hd].set(params['adst1'][hd])
    w1ext = jnp.concatenate([params['W1'], params['W1'] @ A1], axis=1)       # (F_in, HC+2H)

    W2 = params['W2']
    cpack = jnp.zeros((R, W), jnp.float32)
    cpack = cpack.at[o_exp:o_exp + H, :HN].set(expand_n)
    cpack = cpack.at[o_bias, :HC].set(params['b1'].reshape(-1))
    cpack = cpack.at[o_bias + 1, :C2].set(params['b2'].reshape(-1))
    cpack = cpack.at[o_eye:o_eye + N, :HN].set(eye_tile)
    cpack = cpack.at[o_blk:o_blk + HN, :HC].set(blkmask)
    cpack = cpack.at[o_blk:o_blk + HN, HC:HC + H].set(expand_n.T)
    cpack = cpack.at[o_w1:o_w1 + F_in, :HC + 2 * H].set(w1ext)
    cpack = cpack.at[o_w2:o_w2 + HC, :C2].set(W2)
    cpack = cpack.at[o_w2:o_w2 + HC, C2].set(W2 @ params['asrc2'].reshape(-1))
    cpack = cpack.at[o_w2:o_w2 + HC, C2 + 1].set(W2 @ params['adst2'].reshape(-1))

    offs = dict(o_exp=o_exp, o_bias=o_bias, o_eye=o_eye, o_blk=o_blk,
                o_w1=o_w1, o_w2=o_w2, OUTW=OUTW)
    return cpack, offs


def gat_edgeweight_forward(params, x, adj, ew, *, heads, num_hidden, num_classes):
    """Batched GAT_edgeweight forward (eval mode).

    x: (B, N, F) or (N, F); adj/ew: dense per-graph (B, N, N) with adj[b,i,j]=1 iff edge j->i
    (self-loops included, self-loop edge weight 1.0).  Returns (B, N, num_classes).
    """
    squeeze = x.ndim == 2
    if squeeze:
        x, adj, ew = x[None], adj[None], ew[None]
    B, N, F_in = x.shape
    HC, HN = heads * num_hidden, heads * N

    cpack, o = _pack_params(params, F_in=F_in, N=N, heads=heads,
                            hidden=num_hidden, num_classes=num_classes)
    OUTW = o['OUTW']

    # Per-graph input: [adjacency pre-tiled to the (N, H*N) slab | edge-weight matrix].
    graph = jnp.concatenate([jnp.tile(adj, (1, 1, heads)), ew], axis=2)      # (B, N, HN+N)

    kernel = _make_kernel(N=N, F_in=F_in, heads=heads, hidden=num_hidden,
                          num_classes=num_classes, HN=HN, HC=HC, OUTW=OUTW,
                          o_exp=o['o_exp'], o_bias=o['o_bias'], o_eye=o['o_eye'],
                          o_blk=o['o_blk'], o_w1=o['o_w1'], o_w2=o['o_w2'])

    out = pl.pallas_call(
        kernel,
        out_shape=jax.ShapeDtypeStruct((B, N, OUTW), jnp.float32),
        grid=(B,),
        in_specs=[
            pl.BlockSpec((1, N, F_in), lambda b: (b, 0, 0)),      # per-graph features
            pl.BlockSpec((1, N, HN + N), lambda b: (b, 0, 0)),    # per-graph adj|ew
            pl.BlockSpec(cpack.shape, lambda b: (0, 0)),          # params: fetched once
        ],
        out_specs=pl.BlockSpec((1, N, OUTW), lambda b: (b, 0, 0)),
        compiler_params=pltpu.CompilerParams(dimension_semantics=("parallel",)),
    )(x, graph, cpack)

    out = out[:, :, :num_classes]                                  # slice lane-dense slab
    return out[0] if squeeze else out


if __name__ == "__main__":
    key = jax.random.PRNGKey(0)
    ks = jax.random.split(key, 12)

    # Small, module-consistent shapes; B independent graphs to exercise the batch grid axis.
    B, N, in_channels, num_hidden, heads, num_classes = 8, 32, 16, 8, 4, 4
    E = 96

    x = jax.random.normal(ks[0], (B, N, in_channels), jnp.float32)
    src = jax.random.randint(ks[1], (B, E), 0, N)
    dst = jax.random.randint(ks[2], (B, E), 0, N)
    w_e = jax.random.uniform(ks[3], (B, E), jnp.float32, 0.1, 1.0)

    # Densify the graphs (host glue, plain JAX): adj[b, i, j] = 1 iff edge j -> i.
    diag = jnp.arange(N)
    adj_l, ew_l = [], []
    for b in range(B):
        a = jnp.zeros((N, N), jnp.float32).at[dst[b], src[b]].set(1.0)
        w = jnp.zeros((N, N), jnp.float32).at[dst[b], src[b]].set(w_e[b])
        a = a.at[diag, diag].set(1.0)      # add_self_loops=True
        w = w.at[diag, diag].set(1.0)      # self-loop edge weight fill = 1.0
        adj_l.append(a)
        ew_l.append(w)
    adj = jnp.stack(adj_l)
    ew = jnp.stack(ew_l)

    def glorot(k, shape):
        fan_in, fan_out = shape[0], shape[-1]
        lim = (6.0 / (fan_in + fan_out)) ** 0.5
        return jax.random.uniform(k, shape, jnp.float32, -lim, lim)

    params = {
        # conv1: in_channels -> num_hidden per head, `heads` heads, concat
        'W1':    glorot(ks[4], (in_channels, heads * num_hidden)),
        'asrc1': glorot(ks[5], (heads, num_hidden)),
        'adst1': glorot(ks[6], (heads, num_hidden)),
        'b1':    jnp.zeros((1, heads * num_hidden), jnp.float32),
        # conv2: heads*num_hidden -> num_classes, 1 head, no concat
        'W2':    glorot(ks[7], (heads * num_hidden, num_classes)),
        'asrc2': glorot(ks[8], (1, num_classes)),
        'adst2': glorot(ks[9], (1, num_classes)),
        'b2':    jnp.zeros((1, num_classes), jnp.float32),
    }

    out = gat_edgeweight_forward(params, x, adj, ew, heads=heads,
                                 num_hidden=num_hidden, num_classes=num_classes)
    out = jax.block_until_ready(out)
    assert out.shape == (B, N, num_classes) and out.dtype == jnp.float32
    assert bool(jnp.all(jnp.isfinite(out)))
    print("KERNEL_OK")
</pallas_src>

<mosaic_0001>
module attributes {stable_mosaic.version = 11 : i64} {
  func.func @kernel(%arg0: i32, %arg1: memref<1x32x16xf32, #tpu.memory_space<vmem>>, %arg2: memref<1x32x160xf32, #tpu.memory_space<vmem>>, %arg3: memref<224x128xf32, #tpu.memory_space<vmem>>, %arg4: memref<1x32x128xf32, #tpu.memory_space<vmem>>) attributes {dimension_semantics = [#tpu.dimension_semantics<parallel>], iteration_bounds = array<i64: 8>, scalar_prefetch = 0 : i64, scratch_operands = 0 : i64, tpu.core_type = #tpu.core_type<tc>, window_params = [{transform_indices = @transform_0, window_bounds = array<i64: 1, 32, 16>}, {transform_indices = @transform_1, window_bounds = array<i64: 1, 32, 160>}, {pipeline_mode = #tpu.pipeline_mode<synchronous>, transform_indices = @transform_2, window_bounds = array<i64: 224, 128>}, {transform_indices = @transform_3, window_bounds = array<i64: 1, 32, 128>}]} {
    %c0 = arith.constant 0 : index
    %c0_0 = arith.constant 0 : index
    %c0_1 = arith.constant 0 : index
    %0 = vector.load %arg1[%c0, %c0_0, %c0_1] : memref<1x32x16xf32, #tpu.memory_space<vmem>>, vector<1x32x16xf32>
    %1 = vector.shape_cast %0 : vector<1x32x16xf32> to vector<32x16xf32>
    %c0_2 = arith.constant 0 : index
    %c0_3 = arith.constant 0 : index
    %c0_4 = arith.constant 0 : index
    %2 = vector.load %arg2[%c0_2, %c0_3, %c0_4] : memref<1x32x160xf32, #tpu.memory_space<vmem>>, vector<1x32x128xf32>
    %3 = vector.shape_cast %2 : vector<1x32x128xf32> to vector<32x128xf32>
    %c0_5 = arith.constant 0 : index
    %c0_6 = arith.constant 0 : index
    %c0_7 = arith.constant 0 : index
    %4 = vector.load %arg2[%c0_5, %c0_6, %c0_7] : memref<1x32x160xf32, #tpu.memory_space<vmem>>, vector<1x32x32xf32>
    %5 = vector.shape_cast %4 : vector<1x32x32xf32> to vector<32x32xf32>
    %c0_8 = arith.constant 0 : index
    %c0_9 = arith.constant 0 : index
    %c128 = arith.constant 128 : index
    %6 = vector.load %arg2[%c0_8, %c0_9, %c128] : memref<1x32x160xf32, #tpu.memory_space<vmem>>, vector<1x32x32xf32>
    %7 = vector.shape_cast %6 : vector<1x32x32xf32> to vector<32x32xf32>
    %c0_10 = arith.constant 0 : index
    %c0_11 = arith.constant 0 : index
    %8 = vector.load %arg3[%c0_10, %c0_11] : memref<224x128xf32, #tpu.memory_space<vmem>>, vector<4x128xf32>
    %c8 = arith.constant 8 : index
    %c0_12 = arith.constant 0 : index
    %9 = vector.load %arg3[%c8, %c0_12] : memref<224x128xf32, #tpu.memory_space<vmem>>, vector<1x32xf32>
    %c9 = arith.constant 9 : index
    %c0_13 = arith.constant 0 : index
    %10 = vector.load %arg3[%c9, %c0_13] : memref<224x128xf32, #tpu.memory_space<vmem>>, vector<1x128xf32>
    %c16 = arith.constant 16 : index
    %c0_14 = arith.constant 0 : index
    %11 = vector.load %arg3[%c16, %c0_14] : memref<224x128xf32, #tpu.memory_space<vmem>>, vector<32x128xf32>
    %c48 = arith.constant 48 : index
    %c0_15 = arith.constant 0 : index
    %12 = vector.load %arg3[%c48, %c0_15] : memref<224x128xf32, #tpu.memory_space<vmem>>, vector<128x32xf32>
    %c48_16 = arith.constant 48 : index
    %c32 = arith.constant 32 : index
    %13 = vector.load %arg3[%c48_16, %c32] : memref<224x128xf32, #tpu.memory_space<vmem>>, vector<128x4xf32>
    %c176 = arith.constant 176 : index
    %c0_17 = arith.constant 0 : index
    %14 = vector.load %arg3[%c176, %c0_17] : memref<224x128xf32, #tpu.memory_space<vmem>>, vector<16x40xf32>
    %c192 = arith.constant 192 : index
    %c0_18 = arith.constant 0 : index
    %15 = vector.load %arg3[%c192, %c0_18] : memref<224x128xf32, #tpu.memory_space<vmem>>, vector<32x128xf32>
    %cst = arith.constant dense<0.000000e+00> : vector<32x40xf32>
    %16 = tpu.matmul %1, %14, %cst {dimension_numbers = #tpu.dot_dimension_numbers<[1], [0], [0], [1], [0, 0, 1, 1], [], []>} : vector<32x16xf32>, vector<16x40xf32>, vector<32x40xf32> -> vector<32x40xf32>
    %17 = vector.extract_strided_slice %16 {offsets = [0, 0], sizes = [32, 32], strides = [1, 1]} : vector<32x40xf32> to vector<32x32xf32>
    %18 = vector.extract_strided_slice %16 {offsets = [0, 32], sizes = [32, 4], strides = [1, 1]} : vector<32x40xf32> to vector<32x4xf32>
    %19 = vector.extract_strided_slice %16 {offsets = [0, 36], sizes = [32, 4], strides = [1, 1]} : vector<32x40xf32> to vector<32x4xf32>
    %cst_19 = arith.constant dense<0.000000e+00> : vector<32x128xf32>
    %20 = tpu.matmul %19, %8, %cst_19 {dimension_numbers = #tpu.dot_dimension_numbers<[1], [0], [0], [1], [0, 0, 1, 1], [], []>} : vector<32x4xf32>, vector<4x128xf32>, vector<32x128xf32> -> vector<32x128xf32>
    %cst_20 = arith.constant dense<0.000000e+00> : vector<32x128xf32>
    %21 = tpu.matmul %18, %8, %cst_20 {dimension_numbers = #tpu.dot_dimension_numbers<[1], [0], [0], [1], [0, 0, 1, 1], [], []>} : vector<32x4xf32>, vector<4x128xf32>, vector<32x128xf32> -> vector<32x128xf32>
    %22 = arith.mulf %21, %11 : vector<32x128xf32>
    %cst_21 = arith.constant dense<0.000000e+00> : vector<128xf32>
    %23 = vector.multi_reduction <add>, %22, %cst_21 [0] : vector<32x128xf32> to vector<128xf32>
    %24 = vector.shape_cast %23 : vector<128xf32> to vector<1x128xf32>
    %25 = vector.broadcast %24 : vector<1x128xf32> to vector<32x128xf32>
    %26 = arith.addf %20, %25 : vector<32x128xf32>
    %cst_22 = arith.constant 0.000000e+00 : f32
    %27 = vector.broadcast %cst_22 : f32 to vector<32x128xf32>
    %28 = arith.cmpf ogt, %26, %27 : vector<32x128xf32>
    %cst_23 = arith.constant 2.000000e-01 : f32
    %29 = vector.broadcast %cst_23 : f32 to vector<32x128xf32>
    %30 = arith.mulf %29, %26 : vector<32x128xf32>
    %31 = arith.select %28, %26, %30 : vector<32x128xi1>, vector<32x128xf32>
    %cst_24 = arith.constant dense<0xFF800000> : vector<32xf32>
    %32 = vector.multi_reduction <maximumf>, %31, %cst_24 [1] : vector<32x128xf32> to vector<32xf32>
    %33 = vector.shape_cast %32 : vector<32xf32> to vector<32x1xf32>
    %34 = vector.broadcast %33 : vector<32x1xf32> to vector<32x128xf32>
    %35 = arith.subf %31, %34 : vector<32x128xf32>
    %36 = math.exp %35 : vector<32x128xf32>
    %37 = arith.mulf %36, %3 : vector<32x128xf32>
    %cst_25 = arith.constant dense<0.000000e+00> : vector<32x4xf32>
    %38 = tpu.matmul %37, %13, %cst_25 {dimension_numbers = #tpu.dot_dimension_numbers<[1], [0], [0], [1], [0, 0, 1, 1], [], []>} : vector<32x128xf32>, vector<128x4xf32>, vector<32x4xf32> -> vector<32x4xf32>
    %39 = tpu.reciprocal %38 : vector<32x4xf32> -> vector<32x4xf32>
    %cst_26 = arith.constant dense<0.000000e+00> : vector<32x128xf32>
    %40 = tpu.matmul %39, %8, %cst_26 {dimension_numbers = #tpu.dot_dimension_numbers<[1], [0], [0], [1], [0, 0, 1, 1], [], []>} : vector<32x4xf32>, vector<4x128xf32>, vector<32x128xf32> -> vector<32x128xf32>
    %41 = arith.mulf %37, %40 : vector<32x128xf32>
    %42 = tpu.concatenate %17, %17, %17, %17 in 0 : vector<32x32xf32>, vector<32x32xf32>, vector<32x32xf32>, vector<32x32xf32> -> vector<128x32xf32>
    %43 = arith.mulf %42, %12 : vector<128x32xf32>
    %cst_27 = arith.constant dense<0.000000e+00> : vector<32x32xf32>
    %44 = tpu.matmul %41, %43, %cst_27 {dimension_numbers = #tpu.dot_dimension_numbers<[1], [0], [0], [1], [0, 0, 1, 1], [], []>} : vector<32x128xf32>, vector<128x32xf32>, vector<32x32xf32> -> vector<32x32xf32>
    %45 = vector.broadcast %9 : vector<1x32xf32> to vector<32x32xf32>
    %46 = arith.addf %44, %45 : vector<32x32xf32>
    %cst_28 = arith.constant 0.000000e+00 : f32
    %47 = vector.broadcast %cst_28 : f32 to vector<32x32xf32>
    %48 = arith.cmpf ogt, %46, %47 : vector<32x32xf32>
    %49 = math.exp %46 : vector<32x32xf32>
    %cst_29 = arith.constant 1.000000e+00 : f32
    %50 = vector.broadcast %cst_29 : f32 to vector<32x32xf32>
    %51 = arith.subf %49, %50 : vector<32x32xf32>
    %52 = arith.select %48, %46, %51 : vector<32x32xi1>, vector<32x32xf32>
    %cst_30 = arith.constant dense<0.000000e+00> : vector<32x128xf32>
    %53 = tpu.matmul %52, %15, %cst_30 {dimension_numbers = #tpu.dot_dimension_numbers<[1], [0], [0], [1], [0, 0, 1, 1], [], []>} : vector<32x32xf32>, vector<32x128xf32>, vector<32x128xf32> -> vector<32x128xf32>
    %54 = vector.extract_strided_slice %53 {offsets = [0, 4], sizes = [32, 1], strides = [1, 1]} : vector<32x128xf32> to vector<32x1xf32>
    %55 = vector.extract_strided_slice %53 {offsets = [0, 5], sizes = [32, 1], strides = [1, 1]} : vector<32x128xf32> to vector<32x1xf32>
    %56 = vector.extract_strided_slice %11 {offsets = [0, 0], sizes = [32, 32], strides = [1, 1]} : vector<32x128xf32> to vector<32x32xf32>
    %57 = vector.broadcast %54 : vector<32x1xf32> to vector<32x32xf32>
    %58 = arith.mulf %57, %56 : vector<32x32xf32>
    %cst_31 = arith.constant dense<0.000000e+00> : vector<32xf32>
    %59 = vector.multi_reduction <add>, %58, %cst_31 [0] : vector<32x32xf32> to vector<32xf32>
    %60 = vector.shape_cast %59 : vector<32xf32> to vector<1x32xf32>
    %61 = vector.broadcast %55 : vector<32x1xf32> to vector<32x32xf32>
    %62 = vector.broadcast %60 : vector<1x32xf32> to vector<32x32xf32>
    %63 = arith.addf %61, %62 : vector<32x32xf32>
    %cst_32 = arith.constant 0.000000e+00 : f32
    %64 = vector.broadcast %cst_32 : f32 to vector<32x32xf32>
    %65 = arith.cmpf ogt, %63, %64 : vector<32x32xf32>
    %cst_33 = arith.constant 2.000000e-01 : f32
    %66 = vector.broadcast %cst_33 : f32 to vector<32x32xf32>
    %67 = arith.mulf %66, %63 : vector<32x32xf32>
    %68 = arith.select %65, %63, %67 : vector<32x32xi1>, vector<32x32xf32>
    %cst_34 = arith.constant dense<0xFF800000> : vector<32xf32>
    %69 = vector.multi_reduction <maximumf>, %68, %cst_34 [1] : vector<32x32xf32> to vector<32xf32>
    %70 = vector.shape_cast %69 : vector<32xf32> to vector<32x1xf32>
    %71 = vector.broadcast %70 : vector<32x1xf32> to vector<32x32xf32>
    %72 = arith.subf %68, %71 : vector<32x32xf32>
    %73 = math.exp %72 : vector<32x32xf32>
    %74 = arith.mulf %73, %5 : vector<32x32xf32>
    %cst_35 = arith.constant dense<0.000000e+00> : vector<32xf32>
    %75 = vector.multi_reduction <add>, %74, %cst_35 [1] : vector<32x32xf32> to vector<32xf32>
    %76 = vector.shape_cast %75 : vector<32xf32> to vector<32x1xf32>
    %77 = arith.mulf %73, %7 : vector<32x32xf32>
    %cst_36 = arith.constant dense<0.000000e+00> : vector<32x128xf32>
    %78 = tpu.matmul %77, %53, %cst_36 {dimension_numbers = #tpu.dot_dimension_numbers<[1], [0], [0], [1], [0, 0, 1, 1], [], []>} : vector<32x32xf32>, vector<32x128xf32>, vector<32x128xf32> -> vector<32x128xf32>
    %79 = tpu.reciprocal %76 : vector<32x1xf32> -> vector<32x1xf32>
    %80 = vector.broadcast %79 : vector<32x1xf32> to vector<32x128xf32>
    %81 = arith.mulf %78, %80 : vector<32x128xf32>
    %82 = vector.broadcast %10 : vector<1x128xf32> to vector<32x128xf32>
    %83 = arith.addf %81, %82 : vector<32x128xf32>
    %c0_37 = arith.constant 0 : index
    %c0_38 = arith.constant 0 : index
    %c0_39 = arith.constant 0 : index
    %84 = vector.load %arg4[%c0_37, %c0_38, %c0_39] : memref<1x32x128xf32, #tpu.memory_space<vmem>>, vector<1x32x128xf32>
    %85 = vector.shape_cast %84 : vector<1x32x128xf32> to vector<32x128xf32>
    %86 = vector.shape_cast %83 : vector<32x128xf32> to vector<1x32x128xf32>
    tpu.vector_store %arg4[%c0_37, %c0_38, %c0_39], %86 {strides = array<i32>} : memref<1x32x128xf32, #tpu.memory_space<vmem>>, vector<1x32x128xf32>,
    return
  }
  func.func @transform_0(%arg0: i32) -> (i32, i32, i32) {
    %c0_i32 = arith.constant 0 : i32
    %c0_i32_0 = arith.constant 0 : i32
    %c0_i32_1 = arith.constant 0 : i32
    return %arg0, %c0_i32, %c0_i32_0 : i32, i32, i32
  }
  func.func @transform_1(%arg0: i32) -> (i32, i32, i32) {
    %c0_i32 = arith.constant 0 : i32
    %c0_i32_0 = arith.constant 0 : i32
    %c0_i32_1 = arith.constant 0 : i32
    return %arg0, %c0_i32, %c0_i32_0 : i32, i32, i32
  }
  func.func @transform_2(%arg0: i32) -> (i32, i32) {
    %c0_i32 = arith.constant 0 : i32
    %c0_i32_0 = arith.constant 0 : i32
    %c0_i32_1 = arith.constant 0 : i32
    return %c0_i32, %c0_i32_0 : i32, i32
  }
  func.func @transform_3(%arg0: i32) -> (i32, i32, i32) {
    %c0_i32 = arith.constant 0 : i32
    %c0_i32_0 = arith.constant 0 : i32
    %c0_i32_1 = arith.constant 0 : i32
    return %arg0, %c0_i32, %c0_i32_0 : i32, i32, i32
  }
}

</mosaic_0001>

<llo_original>
// kernel: tpu_custom_call.1
$region0: #{tpu_custom_call.1}
  #allocation0 [shape = 'u32[]', space=smem, size = 0x4, offset = 0x4, fixed_abs, tag = 'smem constant byte address 0x4 - core index']
  #allocation1 [shape = 'u32[144,128]{1,0:T(1,128)}', space=vmem, size = 0x12000, scoped, tag = 'internal scratch']
  %s0 = inlined_call_operand.vmem [shape: f32[8,32,16], index: 0, kind: input, shape index: {}]
  %s1 = inlined_call_operand.hbm [shape: f32[8,32,160], index: 1, kind: input, shape index: {}]
  %s2 = inlined_call_operand.vmem [shape: f32[224,128], index: 2, kind: input, shape index: {}]
  %s3 = inlined_call_operand.hbm [shape: f32[8,32,128], index: 3, kind: output, shape index: {}]
  %s4 = sld [smem:[#allocation0]]
  $region49: #{tpu_custom_call.1} parent=0
    _
  %s6 = ssub.s32 1, %s4
  %s7 = scalar_select 0, %s6, %s4
  $region1: #{tpu_custom_call.1} parent=0
    #allocation2 [shape = 'u8[65536]{0}', space=vmem, size = 0x10000, scoped, tag = 'input window, operand 1']
    #allocation3 [shape = 's32[2]{0}', space=sflag, size = 0x8, scoped, tag = 'scoped memory for tpu_custom_call.1']
    #allocation4 [shape = 's32[2]{0}', space=sflag, size = 0x8, scoped, tag = 'scoped memory for tpu_custom_call.1']
    #allocation5 [shape = 'u8[32768]{0}', space=vmem, size = 0x8000, scoped, tag = 'output window, operand 0']
    %8 = vsyncpa [#allocation3], 0
    %s9 = scalar_lea.sflag [#allocation3], 1
    %10 = vsyncpa %s9, 0
    %11 = vsyncpa [#allocation4], 0
    %s12 = scalar_lea.sflag [#allocation4], 1
    %13 = vsyncpa %s12, 0
    loop: start=0, step=1, limit=10
    $region2: #{tpu_custom_call.1} parent=1 // loop_pre_header
      _
    $region3: #{tpu_custom_call.1} parent=1 // loop_header
      %s15 = sphi 0, %s19
      %p16 = scmp.ge.s32.totalorder %s15, 10
      %s25 = sphi 0, %s27
      %s28 = sphi 0, %s25
      %s29 = sphi 0, %s28
      %s45 = sphi 0, %s29
      %s51 = sphi 0, %s53
      %s54 = sphi 0, %s51
      %s55 = sphi 0, %s54
      %s71 = sphi 0, %s55
      %s75 = sphi 0, %s75
      %s77 = sphi 0, %s75
      %s78 = sphi 0, %s77
      %s92 = sphi 0, %s78
      %s98 = sphi 0, %s100
      %s101 = sphi 0, %s98
      %s102 = sphi 0, %s101
      %s118 = sphi 0, %s102
    $region4: #{tpu_custom_call.1} parent=1 // loop_header_branch
      %18 = sbr.rel (%p16) target = $region8
    $region5: #{tpu_custom_call.1} parent=1 // loop_body
      %s20 = ssub.s32 %s15, 1
      %s21 = ssub.s32 %s15, 2
      %s22 = sadd.s32 %s15, 1
      %s23 = ssub.s32 %s15, %s22
      %p24 = scmp.eq.s32.totalorder %s23, 0
      %s26 = sadd.s32 %s25, 1
      %s27 = scalar_select %p24, %s25, %s26
      %p30 = pneg %p24
      %p31 = scmp.eq.s32.totalorder %s15, 7
      %p32 = por %p30, %p31
      %p33 = scmp.ne.s32.totalorder %s25, %s28
      %p34 = scmp.eq.s32.totalorder %s15, 0
      %p35 = por %p33, %p34
      %p36 = scmp.ne.s32.totalorder %s25, %s28
      %p37 = scmp.eq.s32.totalorder %s20, 7
      %p38 = por %p36, %p37
      %p39 = scmp.ne.s32.totalorder %s28, %s29
      %p40 = scmp.eq.s32.totalorder %s20, 0
      %p41 = por %p39, %p40
      %p42 = scmp.ne.s32.totalorder %s28, %s29
      %p43 = scmp.eq.s32.totalorder %s21, 7
      %p44 = por %p42, %p43
      %p46 = scmp.ne.s32.totalorder %s29, %s45
      %p47 = scmp.eq.s32.totalorder %s21, 0
      %p48 = por %p46, %p47
      %s49 = ssub.s32 %s15, %s22
      %p50 = scmp.eq.s32.totalorder %s49, 0
      %s52 = sadd.s32 %s51, 1
      %s53 = scalar_select %p50, %s51, %s52
      %p56 = pneg %p50
      %p57 = scmp.eq.s32.totalorder %s15, 7
      %p58 = por %p56, %p57
      %p59 = scmp.ne.s32.totalorder %s51, %s54
      %p60 = scmp.eq.s32.totalorder %s15, 0
      %p61 = por %p59, %p60
      %p62 = scmp.ne.s32.totalorder %s51, %s54
      %p63 = scmp.eq.s32.totalorder %s20, 7
      %p64 = por %p62, %p63
      %p65 = scmp.ne.s32.totalorder %s54, %s55
      %p66 = scmp.eq.s32.totalorder %s20, 0
      %p67 = por %p65, %p66
      %p68 = scmp.ne.s32.totalorder %s54, %s55
      %p69 = scmp.eq.s32.totalorder %s21, 7
      %p70 = por %p68, %p69
      %p72 = scmp.ne.s32.totalorder %s55, %s71
      %p73 = scmp.eq.s32.totalorder %s21, 0
      %p74 = por %p72, %p73
      %s76 = sadd.s32 %s75, 1
      %p79 = scmp.eq.s32.totalorder %s15, 7
      %p80 = scmp.ne.s32.totalorder %s75, %s77
      %p81 = scmp.eq.s32.totalorder %s15, 0
      %p82 = por %p80, %p81
      %p83 = scmp.ne.s32.totalorder %s75, %s77
      %p84 = scmp.eq.s32.totalorder %s20, 7
      %p85 = por %p83, %p84
      %p86 = scmp.ne.s32.totalorder %s77, %s78
      %p87 = scmp.eq.s32.totalorder %s20, 0
      %p88 = por %p86, %p87
      %p89 = scmp.ne.s32.totalorder %s77, %s78
      %p90 = scmp.eq.s32.totalorder %s21, 7
      %p91 = por %p89, %p90
      %p93 = scmp.ne.s32.totalorder %s78, %s92
      %p94 = scmp.eq.s32.totalorder %s21, 0
      %p95 = por %p93, %p94
      %s96 = ssub.s32 %s15, %s22
      %p97 = scmp.eq.s32.totalorder %s96, 0
      %s99 = sadd.s32 %s98, 1
      %s100 = scalar_select %p97, %s98, %s99
      %p103 = pneg %p97
      %p104 = scmp.eq.s32.totalorder %s15, 7
      %p105 = por %p103, %p104
      %p106 = scmp.ne.s32.totalorder %s98, %s101
      %p107 = scmp.eq.s32.totalorder %s15, 0
      %p108 = por %p106, %p107
      %p109 = scmp.ne.s32.totalorder %s98, %s101
      %p110 = scmp.eq.s32.totalorder %s20, 7
      %p111 = por %p109, %p110
      %p112 = scmp.ne.s32.totalorder %s101, %s102
      %p113 = scmp.eq.s32.totalorder %s20, 0
      %p114 = por %p112, %p113
      %p115 = scmp.ne.s32.totalorder %s101, %s102
      %p116 = scmp.eq.s32.totalorder %s21, 7
      %p117 = por %p115, %p116
      %p119 = scmp.ne.s32.totalorder %s102, %s118
      %p120 = scmp.eq.s32.totalorder %s21, 0
      %p121 = por %p119, %p120
      %p122 = scmp.le.s32.totalorder 1, %s15
      %p123 = scmp.lt.s32.totalorder %s15, 9
      %p124 = pnand %p122, %p123
      %p125 = pneg %p124
      // Predicated region
      $region9: #{tpu_custom_call.1} parent=5 // pred_check
        _
      $region10: #{tpu_custom_call.1} parent=5 // pred_check_branch
        %127 = sbr.rel (%p124) target = $region12
      $region11: #{tpu_custom_call.1} parent=5 // pred_region
        %s128 = ssub.s32 %s15, 1
        // Predicated region
        $region13: #{tpu_custom_call.1} parent=11 // pred_check
          %p129 = pneg %p88
        $region14: #{tpu_custom_call.1} parent=11 // pred_check_branch
          %131 = sbr.rel (%p129) target = $region16
        $region15: #{tpu_custom_call.1} parent=11 // pred_region
          _
        $region16: #{tpu_custom_call.1} parent=11 // pred_fallthru
          _
      $region12: #{tpu_custom_call.1} parent=5 // pred_fallthru
        _
      %p132 = scmp.lt.s32.totalorder %s15, 8
      // Predicated region
      $region17: #{tpu_custom_call.1} parent=5 // pred_check
        %p133 = pneg %p132
      $region18: #{tpu_custom_call.1} parent=5 // pred_check_branch
        %135 = sbr.rel (%p133) target = $region20
      $region19: #{tpu_custom_call.1} parent=5 // pred_region
        // Predicated region
        $region21: #{tpu_custom_call.1} parent=19 // pred_check
          %p136 = pneg %p35
        $region22: #{tpu_custom_call.1} parent=19 // pred_check_branch
          %138 = sbr.rel (%p136) target = $region24
        $region23: #{tpu_custom_call.1} parent=19 // pred_region
          %p139 = scmp.lt.s32.totalorder %s15, 7
          %s140 = scalar_select %p139, %s15, 7
          %s141 = smul.addr %s140, 4
          %s142 = smul.addr %s141, 8
          %s143 = scalar_lea.vmem %s0, %s142
        $region24: #{tpu_custom_call.1} parent=19 // pred_fallthru
          _
        // Predicated region
        $region25: #{tpu_custom_call.1} parent=19 // pred_check
          %p144 = pneg %p61
        $region26: #{tpu_custom_call.1} parent=19 // pred_check_branch
          %146 = sbr.rel (%p144) target = $region28
        $region27: #{tpu_custom_call.1} parent=19 // pred_region
          %s147 = sand.u32 %s51, 1
          %s148 = scalar_lea.sflag [#allocation3], %s147
          %s149 = sand.u32 %s51, 1
          %s150 = smul.addr %s149, 64
          %s151 = scalar_lea.vmem [#allocation2], %s150
          %s153 = ssub.s32 1024, 1024
          %154 = vsyncadd %s148, %s153
          %s155 = smul.addr %s15, 8
          %s156 = smul.addr %s155, 128
          %s157 = scalar_lea.hbm %s1, %s156
          %s158 = sshll.u32 %s151, 4
          %s159 = int_to_ptr.vmem [resolvable:$true] %s158
          %164 = dma.hbm_to_vmem [thread:$0]  %s157, 1024, %s159, %s148, 256, 256, 16
        $region28: #{tpu_custom_call.1} parent=19 // pred_fallthru
          _
      $region20: #{tpu_custom_call.1} parent=5 // pred_fallthru
        _
      %p165 = scmp.le.s32.totalorder 1, %s15
      %p166 = scmp.lt.s32.totalorder %s15, 9
      %p167 = pnand %p165, %p166
      %p168 = pneg %p167
      // Predicated region
      $region29: #{tpu_custom_call.1} parent=5 // pred_check
        _
      $region30: #{tpu_custom_call.1} parent=5 // pred_check_branch
        %170 = sbr.rel (%p167) target = $region32
      $region31: #{tpu_custom_call.1} parent=5 // pred_region
        %s171 = ssub.s32 %s15, 1
        %s172 = sand.u32 %s54, 1
        %s173 = scalar_lea.sflag [#allocation3], %s172
        %s174 = sand.u32 %s54, 1
        %s175 = smul.addr %s174, 64
        %s176 = scalar_lea.vmem [#allocation2], %s175
        // Predicated region
        $region33: #{tpu_custom_call.1} parent=31 // pred_check
          %p177 = pneg %p67
        $region34: #{tpu_custom_call.1} parent=31 // pred_check_branch
          %179 = sbr.rel (%p177) target = $region36
        $region35: #{tpu_custom_call.1} parent=31 // pred_region
          %180 = dma.done %s173, 1024
        $region36: #{tpu_custom_call.1} parent=31 // pred_fallthru
          _
        %p181 = scmp.lt.s32.totalorder %s20, 7
        %s182 = scalar_select %p181, %s20, 7
        %s183 = smul.addr %s182, 4
        %s184 = smul.addr %s183, 8
        %s185 = scalar_lea.vmem %s0, %s184
        %p186 = pneg %p41
        %p187 = pneg %p38
        %s188 = sand.u32 %s54, 1
        %s189 = scalar_lea.sflag [#allocation3], %s188
        %s190 = sand.u32 %s54, 1
        %s191 = smul.addr %s190, 64
        %s192 = scalar_lea.vmem [#allocation2], %s191
        %p193 = pneg %p67
        %p194 = pneg %p64
        %p195 = pneg %p88
        %p196 = pneg %p85
        %p197 = pneg %p114
        %p198 = pneg %p111
        %s199 = sand.u32 %s101, 1
        %s200 = scalar_lea.sflag [#allocation4], %s199
        %s201 = sand.u32 %s101, 1
        %s202 = smul.addr %s201, 32
        %s203 = scalar_lea.vmem [#allocation5], %s202
        %p204 = scmp.lt.s32.totalorder %s20, 7
        %s205 = scalar_select %p204, %s20, 7
        %s206 = smul.addr %s205, 4
        %s207 = smul.addr %s206, 8
        %s208 = scalar_lea.vmem %s0, %s207
        %v209 = vld [vmem:[%s208] sm:$0xff]
        %v210 = vld [vmem:[%s208 + $0x8] sm:$0xff]
        %v211 = vld [vmem:[%s208 + $0x10] sm:$0xff]
        %v212 = vld [vmem:[%s208 + $0x18] sm:$0xff]
        %v213 = vld [vmem:[%s176] sm:$0xff]
        %v214 = vld [vmem:[%s176 + $0x10] sm:$0xff]
        %v215 = vld [vmem:[%s176 + $0x20] sm:$0xff]
        %v216 = vld [vmem:[%s176 + $0x30] sm:$0xff]
        %v217 = vld [vmem:[%s176 + $0x8] sm:$0xff]
        %v218 = vld [vmem:[%s176 + $0x18] sm:$0xff]
        %v219 = vld [vmem:[%s176 + $0x28] sm:$0xff]
        %v220 = vld [vmem:[%s176 + $0x38] sm:$0xff]
        %v221 = vld [vmem:[%s2] sm:$0xf]
        %v222 = vld [vmem:[%s2 + $0x8] sm:$0x1]
        %v223 = vld [vmem:[%s2 + $0x9] sm:$0x1]
        %v224 = vld [vmem:[%s2 + $0x10] sm:$0xff]
        %v225 = vld [vmem:[%s2 + $0x18] sm:$0xff]
        %v226 = vld [vmem:[%s2 + $0x20] sm:$0xff]
        %v227 = vld [vmem:[%s2 + $0x28] sm:$0xff]
        %v228 = vld [vmem:[%s2 + $0x30] sm:$0xff]
        %v229 = vld [vmem:[%s2 + $0x38] sm:$0xff]
        %v230 = vld [vmem:[%s2 + $0x40] sm:$0xff]
        %v231 = vld [vmem:[%s2 + $0x48] sm:$0xff]
        %v232 = vld [vmem:[%s2 + $0x50] sm:$0xff]
        %v233 = vld [vmem:[%s2 + $0x58] sm:$0xff]
        %v234 = vld [vmem:[%s2 + $0x60] sm:$0xff]
        %v235 = vld [vmem:[%s2 + $0x68] sm:$0xff]
        %v236 = vld [vmem:[%s2 + $0x70] sm:$0xff]
        %v237 = vld [vmem:[%s2 + $0x78] sm:$0xff]
        %v238 = vld [vmem:[%s2 + $0x80] sm:$0xff]
        %v239 = vld [vmem:[%s2 + $0x88] sm:$0xff]
        %v240 = vld [vmem:[%s2 + $0x90] sm:$0xff]
        %v241 = vld [vmem:[%s2 + $0x98] sm:$0xff]
        %v242 = vld [vmem:[%s2 + $0xa0] sm:$0xff]
        %v243 = vld [vmem:[%s2 + $0xa8] sm:$0xff]
        %v244 = vld [vmem:[%s2 + $0xb0] sm:$0xff]
        %v245 = vld [vmem:[%s2 + $0xb8] sm:$0xff]
        %v246 = vld [vmem:[%s2 + $0xc0] sm:$0xff]
        %v247 = vld [vmem:[%s2 + $0xc8] sm:$0xff]
        %v248 = vld [vmem:[%s2 + $0xd0] sm:$0xff]
        %v249 = vld [vmem:[%s2 + $0xd8] sm:$0xff]
        %vm250 = vcmask 130048
        %v252 = vsel %vm250, %v209, 0
        %v255 = vsel %vm250, %v210, 0
        %v258 = vsel %vm250, %v211, 0
        %v261 = vsel %vm250, %v212, 0
        %263 = vmatprep.subr.mxu0 0.0
        %264 = vmatpush1.msra.mxu0 %v244
        %265 = vmatprep.subr.mxu0 0.0
        %266 = vmatpush1.msra.mxu0 %v245
        %267 = vmatprep.subr.mxu0 0.0
        %268 = vmatpush1.msra.mxu0 0.0
        %269 = vmatprep.subr.mxu0 0.0
        %270 = vmatpush1.msra.mxu0 0.0
        %271 = vmatprep.subr.mxu0 0.0
        %272 = vmatpush1.msra.mxu0 0.0
        %273 = vmatprep.subr.mxu0 0.0
        %274 = vmatpush1.msra.mxu0 0.0
        %275 = vmatprep.subr.mxu0 0.0
        %276 = vmatpush1.msra.mxu0 0.0
        %277 = vmatprep.subr.mxu0 0.0
        %278 = vmatpush1.msra.mxu0 0.0
        %279 = vmatprep.subr.mxu0 0.0
        %280 = vmatpush1.msra.mxu0 0.0
        %281 = vmatprep.subr.mxu0 0.0
        %282 = vmatpush1.msra.mxu0 0.0
        %283 = vmatprep.subr.mxu0 0.0
        %284 = vmatpush1.msra.mxu0 0.0
        %285 = vmatprep.subr.mxu0 0.0
        %286 = vmatpush1.msra.mxu0 0.0
        %287 = vmatprep.subr.mxu0 0.0
        %288 = vmatpush1.msra.mxu0 0.0
        %289 = vmatprep.subr.mxu0 0.0
        %290 = vmatpush1.msra.mxu0 0.0
        %291 = vmatprep.subr.mxu0 0.0
        %292 = vmatpush1.msra.mxu0 0.0
        %293 = vmatprep.subr.mxu0 0.0
        %294 = vmatpush1.msra.mxu0 0.0
        %295 = vmatprep.subr.mxu0 0.0
        %296 = vmatpush1.msra.mxu0 0.0
        %297 = vmatprep.subr.mxu0 0.0
        %298 = vmatpush1.msra.mxu0 0.0
        %299 = vmatprep.subr.mxu0 0.0
        %300 = vmatpush1.msra.mxu0 0.0
        %301 = vmatprep.subr.mxu0 0.0
        %302 = vmatpush1.msra.mxu0 0.0
        %303 = vmatprep.subr.mxu0 0.0
        %304 = vmatpush1.msra.mxu0 0.0
        %305 = vmatprep.subr.mxu0 0.0
        %306 = vmatpush1.msra.mxu0 0.0
        %307 = vmatprep.subr.mxu0 0.0
        %308 = vmatpush1.msra.mxu0 0.0
        %309 = vmatprep.subr.mxu0 0.0
        %310 = vmatpush1.msra.mxu0 0.0
        %311 = vmatprep.subr.mxu0 0.0
        %312 = vmatpush1.msra.mxu0 0.0
        %313 = vmatprep.subr.mxu0 0.0
        %314 = vmatpush1.msra.mxu0 0.0
        %315 = vmatprep.subr.mxu0 0.0
        %316 = vmatpush1.msra.mxu0 0.0
        %317 = vmatprep.subr.mxu0 0.0
        %318 = vmatpush1.msra.mxu0 0.0
        %319 = vmatprep.subr.mxu0 0.0
        %320 = vmatpush1.msra.mxu0 0.0
        %321 = vmatprep.subr.mxu0 0.0
        %322 = vmatpush1.msra.mxu0 0.0
        %323 = vmatprep.subr.mxu0 0.0
        %324 = vmatpush1.msra.mxu0 0.0
        %325 = vmatprep.subr.mxu0 0.0
        %326 = vmatpush1.msra.mxu0 0.0
        %327 = vmatprep.mubr.f32.mxu0 0.0
        %328 = vmatmul.mubr.f32.gmra.mrb[0].mxu0 %v252
        %v329 = vpop.f32.mrb[0].mxu0
        %v330 = vadd.f32 0.0, %v329
        %v331 = vpop.f32.mrb[0].mxu0
        %332 = vmatprep.mubr.f32.mxu0 0.0
        %333 = vmatmul.mubr.f32.gmra.mrb[0].mxu0 %v255
        %v334 = vpop.f32.mrb[0].mxu0
        %v335 = vadd.f32 0.0, %v334
        %v336 = vpop.f32.mrb[0].mxu0
        %337 = vmatprep.mubr.f32.mxu0 0.0
        %338 = vmatmul.mubr.f32.gmra.mrb[0].mxu0 %v258
        %v339 = vpop.f32.mrb[0].mxu0
        %v340 = vadd.f32 0.0, %v339
        %v341 = vpop.f32.mrb[0].mxu0
        %342 = vmatprep.mubr.f32.mxu0 0.0
        %343 = vmatmul.mubr.f32.gmra.mrb[0].mxu0 %v261
        %v344 = vpop.f32.mrb[0].mxu0
        %v345 = vadd.f32 0.0, %v344
        %v346 = vpop.f32.mrb[0].mxu0
        %347 = vdwg.mxu0
        %352 = vrot.lane.b32.xlu0 %v330, 96
        %v353 = vpop.permute.xlu0 %352
        %354 = vrot.lane.b32.xlu0 %v335, 96
        %v355 = vpop.permute.xlu0 %354
        %356 = vrot.lane.b32.xlu0 %v340, 96
        %v357 = vpop.permute.xlu0 %356
        %358 = vrot.lane.b32.xlu0 %v345, 96
        %v359 = vpop.permute.xlu0 %358
        %vm360 = vcmask 31744
        %v361 = vsel %vm360, %v353, 0
        %v363 = vsel %vm360, %v355, 0
        %v365 = vsel %vm360, %v357, 0
        %v367 = vsel %vm360, %v359, 0
        %vm369 = vcmask 1043456
        %v371 = vsel %vm369, %v221, 0
        %373 = vmatprep.subr.mxu0 0.0
        %374 = vmatpush1.msra.mxu0 %v371
        %375 = vmatprep.subr.mxu0 0.0
        %376 = vmatpush1.msra.mxu0 0.0
        %377 = vmatprep.subr.mxu0 0.0
        %378 = vmatpush1.msra.mxu0 0.0
        %379 = vmatprep.subr.mxu0 0.0
        %380 = vmatpush1.msra.mxu0 0.0
        %381 = vmatprep.subr.mxu0 0.0
        %382 = vmatpush1.msra.mxu0 0.0
        %383 = vmatprep.subr.mxu0 0.0
        %384 = vmatpush1.msra.mxu0 0.0
        %385 = vmatprep.subr.mxu0 0.0
        %386 = vmatpush1.msra.mxu0 0.0
        %387 = vmatprep.subr.mxu0 0.0
        %388 = vmatpush1.msra.mxu0 0.0
        %389 = vmatprep.subr.mxu0 0.0
        %390 = vmatpush1.msra.mxu0 0.0
        %391 = vmatprep.subr.mxu0 0.0
        %392 = vmatpush1.msra.mxu0 0.0
        %393 = vmatprep.subr.mxu0 0.0
        %394 = vmatpush1.msra.mxu0 0.0
        %395 = vmatprep.subr.mxu0 0.0
        %396 = vmatpush1.msra.mxu0 0.0
        %397 = vmatprep.subr.mxu0 0.0
        %398 = vmatpush1.msra.mxu0 0.0
        %399 = vmatprep.subr.mxu0 0.0
        %400 = vmatpush1.msra.mxu0 0.0
        %401 = vmatprep.subr.mxu0 0.0
        %402 = vmatpush1.msra.mxu0 0.0
        %403 = vmatprep.subr.mxu0 0.0
        %404 = vmatpush1.msra.mxu0 0.0
        %405 = vmatprep.subr.mxu0 0.0
        %406 = vmatpush1.msra.mxu0 0.0
        %407 = vmatprep.subr.mxu0 0.0
        %408 = vmatpush1.msra.mxu0 0.0
        %409 = vmatprep.subr.mxu0 0.0
        %410 = vmatpush1.msra.mxu0 0.0
        %411 = vmatprep.subr.mxu0 0.0
        %412 = vmatpush1.msra.mxu0 0.0
        %413 = vmatprep.subr.mxu0 0.0
        %414 = vmatpush1.msra.mxu0 0.0
        %415 = vmatprep.subr.mxu0 0.0
        %416 = vmatpush1.msra.mxu0 0.0
        %417 = vmatprep.subr.mxu0 0.0
        %418 = vmatpush1.msra.mxu0 0.0
        %419 = vmatprep.subr.mxu0 0.0
        %420 = vmatpush1.msra.mxu0 0.0
        %421 = vmatprep.subr.mxu0 0.0
        %422 = vmatpush1.msra.mxu0 0.0
        %423 = vmatprep.subr.mxu0 0.0
        %424 = vmatpush1.msra.mxu0 0.0
        %425 = vmatprep.subr.mxu0 0.0
        %426 = vmatpush1.msra.mxu0 0.0
        %427 = vmatprep.subr.mxu0 0.0
        %428 = vmatpush1.msra.mxu0 0.0
        %429 = vmatprep.subr.mxu0 0.0
        %430 = vmatpush1.msra.mxu0 0.0
        %431 = vmatprep.subr.mxu0 0.0
        %432 = vmatpush1.msra.mxu0 0.0
        %433 = vmatprep.subr.mxu0 0.0
        %434 = vmatpush1.msra.mxu0 0.0
        %435 = vmatprep.subr.mxu0 0.0
        %436 = vmatpush1.msra.mxu0 0.0
        %437 = vmatprep.mubr.f32.mxu0 0.0
        %438 = vmatmul.mubr.f32.gmra.mrb[0].mxu0 %v361
        %v439 = vpop.f32.mrb[0].mxu0
        %v440 = vadd.f32 0.0, %v439
        %v441 = vpop.f32.mrb[0].mxu0
        %442 = vmatprep.mubr.f32.mxu0 0.0
        %443 = vmatmul.mubr.f32.gmra.mrb[0].mxu0 %v363
        %v444 = vpop.f32.mrb[0].mxu0
        %v445 = vadd.f32 0.0, %v444
        %v446 = vpop.f32.mrb[0].mxu0
        %447 = vmatprep.mubr.f32.mxu0 0.0
        %448 = vmatmul.mubr.f32.gmra.mrb[0].mxu0 %v365
        %v449 = vpop.f32.mrb[0].mxu0
        %v450 = vadd.f32 0.0, %v449
        %v451 = vpop.f32.mrb[0].mxu0
        %452 = vmatprep.mubr.f32.mxu0 0.0
        %453 = vmatmul.mubr.f32.gmra.mrb[0].mxu0 %v367
        %v454 = vpop.f32.mrb[0].mxu0
        %v455 = vadd.f32 0.0, %v454
        %v456 = vpop.f32.mrb[0].mxu0
        %457 = vdwg.mxu0
        %v458 = vmul.f32 %v440, %v224
        %v459 = vmul.f32 %v445, %v225
        %v460 = vmul.f32 %v450, %v226
        %v461 = vmul.f32 %v455, %v227
        %v462 = vadd.f32 %v458, %v459
        %v463 = vadd.f32 %v462, %v460
        %v464 = vadd.f32 %v463, %v461
        %v465 = vrot.slane %v464, 4
        %v466 = vadd.f32 %v464, %v465
        %v467 = vrot.slane %v466, 2
        %v468 = vadd.f32 %v466, %v467
        %v469 = vrot.slane %v468, 1
        %v470 = vadd.f32 %v468, %v469
        %471 = vrot.lane.b32.xlu0 %v330, 92
        %v472 = vpop.permute.xlu0 %471
        %473 = vrot.lane.b32.xlu0 %v335, 92
        %v474 = vpop.permute.xlu0 %473
        %475 = vrot.lane.b32.xlu0 %v340, 92
        %v476 = vpop.permute.xlu0 %475
        %477 = vrot.lane.b32.xlu0 %v345, 92
        %v478 = vpop.permute.xlu0 %477
        %v479 = vsel %vm360, %v472, 0
        %v481 = vsel %vm360, %v474, 0
        %v483 = vsel %vm360, %v476, 0
        %v485 = vsel %vm360, %v478, 0
        %487 = vmatprep.subr.mxu0 0.0
        %488 = vmatpush1.msra.mxu0 %v371
        %489 = vmatprep.subr.mxu0 0.0
        %490 = vmatpush1.msra.mxu0 0.0
        %491 = vmatprep.subr.mxu0 0.0
        %492 = vmatpush1.msra.mxu0 0.0
        %493 = vmatprep.subr.mxu0 0.0
        %494 = vmatpush1.msra.mxu0 0.0
        %495 = vmatprep.subr.mxu0 0.0
        %496 = vmatpush1.msra.mxu0 0.0
        %497 = vmatprep.subr.mxu0 0.0
        %498 = vmatpush1.msra.mxu0 0.0
        %499 = vmatprep.subr.mxu0 0.0
        %500 = vmatpush1.msra.mxu0 0.0
        %501 = vmatprep.subr.mxu0 0.0
        %502 = vmatpush1.msra.mxu0 0.0
        %503 = vmatprep.subr.mxu0 0.0
        %504 = vmatpush1.msra.mxu0 0.0
        %505 = vmatprep.subr.mxu0 0.0
        %506 = vmatpush1.msra.mxu0 0.0
        %507 = vmatprep.subr.mxu0 0.0
        %508 = vmatpush1.msra.mxu0 0.0
        %509 = vmatprep.subr.mxu0 0.0
        %510 = vmatpush1.msra.mxu0 0.0
        %511 = vmatprep.subr.mxu0 0.0
        %512 = vmatpush1.msra.mxu0 0.0
        %513 = vmatprep.subr.mxu0 0.0
        %514 = vmatpush1.msra.mxu0 0.0
        %515 = vmatprep.subr.mxu0 0.0
        %516 = vmatpush1.msra.mxu0 0.0
        %517 = vmatprep.subr.mxu0 0.0
        %518 = vmatpush1.msra.mxu0 0.0
        %519 = vmatprep.subr.mxu0 0.0
        %520 = vmatpush1.msra.mxu0 0.0
        %521 = vmatprep.subr.mxu0 0.0
        %522 = vmatpush1.msra.mxu0 0.0
        %523 = vmatprep.subr.mxu0 0.0
        %524 = vmatpush1.msra.mxu0 0.0
        %525 = vmatprep.subr.mxu0 0.0
        %526 = vmatpush1.msra.mxu0 0.0
        %527 = vmatprep.subr.mxu0 0.0
        %528 = vmatpush1.msra.mxu0 0.0
        %529 = vmatprep.subr.mxu0 0.0
        %530 = vmatpush1.msra.mxu0 0.0
        %531 = vmatprep.subr.mxu0 0.0
        %532 = vmatpush1.msra.mxu0 0.0
        %533 = vmatprep.subr.mxu0 0.0
        %534 = vmatpush1.msra.mxu0 0.0
        %535 = vmatprep.subr.mxu0 0.0
        %536 = vmatpush1.msra.mxu0 0.0
        %537 = vmatprep.subr.mxu0 0.0
        %538 = vmatpush1.msra.mxu0 0.0
        %539 = vmatprep.subr.mxu0 0.0
        %540 = vmatpush1.msra.mxu0 0.0
        %541 = vmatprep.subr.mxu0 0.0
        %542 = vmatpush1.msra.mxu0 0.0
        %543 = vmatprep.subr.mxu0 0.0
        %544 = vmatpush1.msra.mxu0 0.0
        %545 = vmatprep.subr.mxu0 0.0
        %546 = vmatpush1.msra.mxu0 0.0
        %547 = vmatprep.subr.mxu0 0.0
        %548 = vmatpush1.msra.mxu0 0.0
        %549 = vmatprep.subr.mxu0 0.0
        %550 = vmatpush1.msra.mxu0 0.0
        %551 = vmatprep.mubr.f32.mxu0 0.0
        %552 = vmatmul.mubr.f32.gmra.mrb[0].mxu0 %v479
        %v553 = vpop.f32.mrb[0].mxu0
        %v554 = vadd.f32 %v470, %v553
        %v555 = vpop.f32.mrb[0].mxu0
        %556 = vmatprep.mubr.f32.mxu0 0.0
        %557 = vmatmul.mubr.f32.gmra.mrb[0].mxu0 %v481
        %v558 = vpop.f32.mrb[0].mxu0
        %v559 = vadd.f32 %v470, %v558
        %v560 = vpop.f32.mrb[0].mxu0
        %561 = vmatprep.mubr.f32.mxu0 0.0
        %562 = vmatmul.mubr.f32.gmra.mrb[0].mxu0 %v483
        %v563 = vpop.f32.mrb[0].mxu0
        %v564 = vadd.f32 %v470, %v563
        %v565 = vpop.f32.mrb[0].mxu0
        %566 = vmatprep.mubr.f32.mxu0 0.0
        %567 = vmatmul.mubr.f32.gmra.mrb[0].mxu0 %v485
        %v568 = vpop.f32.mrb[0].mxu0
        %v569 = vadd.f32 %v470, %v568
        %v570 = vpop.f32.mrb[0].mxu0
        %571 = vdwg.mxu0
        %vm572 = vcmp.gt.f32.partialorder %v554, 0.0
        %vm573 = vcmp.gt.f32.partialorder %v559, 0.0
        %vm574 = vcmp.gt.f32.partialorder %v564, 0.0
        %vm575 = vcmp.gt.f32.partialorder %v569, 0.0
        %v576 = vmul.f32 %v554, 0.2
        %v577 = vmul.f32 %v559, 0.2
        %v578 = vmul.f32 %v564, 0.2
        %v579 = vmul.f32 %v569, 0.2
        %v580 = vsel %vm572, %v554, %v576
        %v581 = vsel %vm573, %v559, %v577
        %v582 = vsel %vm574, %v564, %v578
        %v583 = vsel %vm575, %v569, %v579
        %584 = vmax.xlane.f32.xlu0 %v580
        %v585 = vpop.xlane.xlu0 %584
        %586 = vmax.xlane.f32.xlu0 %v581
        %v587 = vpop.xlane.xlu0 %586
        %588 = vmax.xlane.f32.xlu0 %v582
        %v589 = vpop.xlane.xlu0 %588
        %590 = vmax.xlane.f32.xlu0 %v583
        %v591 = vpop.xlane.xlu0 %590
        %v592 = vsub.f32 %v580, %v585
        %v593 = vsub.f32 %v581, %v587
        %v594 = vsub.f32 %v582, %v589
        %v595 = vsub.f32 %v583, %v591
        %v596 = vmul.f32 %v592, 1.442695
        %v597 = vpow.pop %v596
        %v598 = vmul.f32 %v593, 1.442695
        %v599 = vpow.pop %v598
        %v600 = vmul.f32 %v594, 1.442695
        %v601 = vpow.pop %v600
        %v602 = vmul.f32 %v595, 1.442695
        %v603 = vpow.pop %v602
        %v604 = vmul.f32 %v597, %v213
        %v605 = vmul.f32 %v599, %v214
        %v606 = vmul.f32 %v601, %v215
        %v607 = vmul.f32 %v603, %v216
        %624 = vrot.lane.b32.xlu0 %v228, 96
        %v625 = vpop.permute.xlu0 %624
        %626 = vrot.lane.b32.xlu0 %v229, 96
        %v627 = vpop.permute.xlu0 %626
        %628 = vrot.lane.b32.xlu0 %v230, 96
        %v629 = vpop.permute.xlu0 %628
        %630 = vrot.lane.b32.xlu0 %v231, 96
        %v631 = vpop.permute.xlu0 %630
        %632 = vrot.lane.b32.xlu0 %v232, 96
        %v633 = vpop.permute.xlu0 %632
        %634 = vrot.lane.b32.xlu0 %v233, 96
        %v635 = vpop.permute.xlu0 %634
        %636 = vrot.lane.b32.xlu0 %v234, 96
        %v637 = vpop.permute.xlu0 %636
        %638 = vrot.lane.b32.xlu0 %v235, 96
        %v639 = vpop.permute.xlu0 %638
        %640 = vrot.lane.b32.xlu0 %v236, 96
        %v641 = vpop.permute.xlu0 %640
        %642 = vrot.lane.b32.xlu0 %v237, 96
        %v643 = vpop.permute.xlu0 %642
        %644 = vrot.lane.b32.xlu0 %v238, 96
        %v645 = vpop.permute.xlu0 %644
        %646 = vrot.lane.b32.xlu0 %v239, 96
        %v647 = vpop.permute.xlu0 %646
        %648 = vrot.lane.b32.xlu0 %v240, 96
        %v649 = vpop.permute.xlu0 %648
        %650 = vrot.lane.b32.xlu0 %v241, 96
        %v651 = vpop.permute.xlu0 %650
        %652 = vrot.lane.b32.xlu0 %v242, 96
        %v653 = vpop.permute.xlu0 %652
        %654 = vrot.lane.b32.xlu0 %v243, 96
        %v655 = vpop.permute.xlu0 %654
        %672 = vmatprep.subr.mxu0 0.0
        %673 = vmatpush1.msra.mxu0 %v625
        %674 = vmatprep.subr.mxu0 0.0
        %675 = vmatpush1.msra.mxu0 %v627
        %676 = vmatprep.subr.mxu0 0.0
        %677 = vmatpush1.msra.mxu0 %v629
        %678 = vmatprep.subr.mxu0 0.0
        %679 = vmatpush1.msra.mxu0 %v631
        %680 = vmatprep.subr.mxu0 0.0
        %681 = vmatpush1.msra.mxu0 %v633
        %682 = vmatprep.subr.mxu0 0.0
        %683 = vmatpush1.msra.mxu0 %v635
        %684 = vmatprep.subr.mxu0 0.0
        %685 = vmatpush1.msra.mxu0 %v637
        %686 = vmatprep.subr.mxu0 0.0
        %687 = vmatpush1.msra.mxu0 %v639
        %688 = vmatprep.subr.mxu0 0.0
        %689 = vmatpush1.msra.mxu0 %v641
        %690 = vmatprep.subr.mxu0 0.0
        %691 = vmatpush1.msra.mxu0 %v643
        %692 = vmatprep.subr.mxu0 0.0
        %693 = vmatpush1.msra.mxu0 %v645
        %694 = vmatprep.subr.mxu0 0.0
        %695 = vmatpush1.msra.mxu0 %v647
        %696 = vmatprep.subr.mxu0 0.0
        %697 = vmatpush1.msra.mxu0 %v649
        %698 = vmatprep.subr.mxu0 0.0
        %699 = vmatpush1.msra.mxu0 %v651
        %700 = vmatprep.subr.mxu0 0.0
        %701 = vmatpush1.msra.mxu0 %v653
        %702 = vmatprep.subr.mxu0 0.0
        %703 = vmatpush1.msra.mxu0 %v655
        %704 = vmatprep.subr.mxu0 0.0
        %705 = vmatpush1.msra.mxu0 0.0
        %706 = vmatprep.subr.mxu0 0.0
        %707 = vmatpush1.msra.mxu0 0.0
        %708 = vmatprep.subr.mxu0 0.0
        %709 = vmatpush1.msra.mxu0 0.0
        %710 = vmatprep.subr.mxu0 0.0
        %711 = vmatpush1.msra.mxu0 0.0
        %712 = vmatprep.subr.mxu0 0.0
        %713 = vmatpush1.msra.mxu0 0.0
        %714 = vmatprep.subr.mxu0 0.0
        %715 = vmatpush1.msra.mxu0 0.0
        %716 = vmatprep.subr.mxu0 0.0
        %717 = vmatpush1.msra.mxu0 0.0
        %718 = vmatprep.subr.mxu0 0.0
        %719 = vmatpush1.msra.mxu0 0.0
        %720 = vmatprep.subr.mxu0 0.0
        %721 = vmatpush1.msra.mxu0 0.0
        %722 = vmatprep.subr.mxu0 0.0
        %723 = vmatpush1.msra.mxu0 0.0
        %724 = vmatprep.subr.mxu0 0.0
        %725 = vmatpush1.msra.mxu0 0.0
        %726 = vmatprep.subr.mxu0 0.0
        %727 = vmatpush1.msra.mxu0 0.0
        %728 = vmatprep.subr.mxu0 0.0
        %729 = vmatpush1.msra.mxu0 0.0
        %730 = vmatprep.subr.mxu0 0.0
        %731 = vmatpush1.msra.mxu0 0.0
        %732 = vmatprep.subr.mxu0 0.0
        %733 = vmatpush1.msra.mxu0 0.0
        %734 = vmatprep.subr.mxu0 0.0
        %735 = vmatpush1.msra.mxu0 0.0
        %736 = vmatprep.mubr.f32.mxu0 0.0
        %737 = vmatmul.mubr.f32.gmra.mrb[0].mxu0 %v604
        %v738 = vpop.f32.mrb[0].mxu0
        %v739 = vadd.f32 0.0, %v738
        %v740 = vpop.f32.mrb[0].mxu0
        %741 = vmatprep.mubr.f32.mxu0 0.0
        %742 = vmatmul.mubr.f32.gmra.mrb[0].mxu0 %v605
        %v743 = vpop.f32.mrb[0].mxu0
        %v744 = vadd.f32 0.0, %v743
        %v745 = vpop.f32.mrb[0].mxu0
        %746 = vmatprep.mubr.f32.mxu0 0.0
        %747 = vmatmul.mubr.f32.gmra.mrb[0].mxu0 %v606
        %v748 = vpop.f32.mrb[0].mxu0
        %v749 = vadd.f32 0.0, %v748
        %v750 = vpop.f32.mrb[0].mxu0
        %751 = vmatprep.mubr.f32.mxu0 0.0
        %752 = vmatmul.mubr.f32.gmra.mrb[0].mxu0 %v607
        %v753 = vpop.f32.mrb[0].mxu0
        %v754 = vadd.f32 0.0, %v753
        %v755 = vpop.f32.mrb[0].mxu0
        %756 = vdwg.mxu0
        %v757 = vrcp.pop %v739
        %v758 = vrcp.pop %v744
        %v759 = vrcp.pop %v749
        %v760 = vrcp.pop %v754
        %v762 = vsel %vm360, %v757, 0
        %v765 = vsel %vm360, %v758, 0
        %v768 = vsel %vm360, %v759, 0
        %v771 = vsel %vm360, %v760, 0
        %773 = vmatprep.subr.mxu0 0.0
        %774 = vmatpush1.msra.mxu0 %v371
        %775 = vmatprep.subr.mxu0 0.0
        %776 = vmatpush1.msra.mxu0 0.0
        %777 = vmatprep.subr.mxu0 0.0
        %778 = vmatpush1.msra.mxu0 0.0
        %779 = vmatprep.subr.mxu0 0.0
        %780 = vmatpush1.msra.mxu0 0.0
        %781 = vmatprep.subr.mxu0 0.0
        %782 = vmatpush1.msra.mxu0 0.0
        %783 = vmatprep.subr.mxu0 0.0
        %784 = vmatpush1.msra.mxu0 0.0
        %785 = vmatprep.subr.mxu0 0.0
        %786 = vmatpush1.msra.mxu0 0.0
        %787 = vmatprep.subr.mxu0 0.0
        %788 = vmatpush1.msra.mxu0 0.0
        %789 = vmatprep.subr.mxu0 0.0
        %790 = vmatpush1.msra.mxu0 0.0
        %791 = vmatprep.subr.mxu0 0.0
        %792 = vmatpush1.msra.mxu0 0.0
        %793 = vmatprep.subr.mxu0 0.0
        %794 = vmatpush1.msra.mxu0 0.0
        %795 = vmatprep.subr.mxu0 0.0
        %796 = vmatpush1.msra.mxu0 0.0
        %797 = vmatprep.subr.mxu0 0.0
        %798 = vmatpush1.msra.mxu0 0.0
        %799 = vmatprep.subr.mxu0 0.0
        %800 = vmatpush1.msra.mxu0 0.0
        %801 = vmatprep.subr.mxu0 0.0
        %802 = vmatpush1.msra.mxu0 0.0
        %803 = vmatprep.subr.mxu0 0.0
        %804 = vmatpush1.msra.mxu0 0.0
        %805 = vmatprep.subr.mxu0 0.0
        %806 = vmatpush1.msra.mxu0 0.0
        %807 = vmatprep.subr.mxu0 0.0
        %808 = vmatpush1.msra.mxu0 0.0
        %809 = vmatprep.subr.mxu0 0.0
        %810 = vmatpush1.msra.mxu0 0.0
        %811 = vmatprep.subr.mxu0 0.0
        %812 = vmatpush1.msra.mxu0 0.0
        %813 = vmatprep.subr.mxu0 0.0
        %814 = vmatpush1.msra.mxu0 0.0
        %815 = vmatprep.subr.mxu0 0.0
        %816 = vmatpush1.msra.mxu0 0.0
        %817 = vmatprep.subr.mxu0 0.0
        %818 = vmatpush1.msra.mxu0 0.0
        %819 = vmatprep.subr.mxu0 0.0
        %820 = vmatpush1.msra.mxu0 0.0
        %821 = vmatprep.subr.mxu0 0.0
        %822 = vmatpush1.msra.mxu0 0.0
        %823 = vmatprep.subr.mxu0 0.0
        %824 = vmatpush1.msra.mxu0 0.0
        %825 = vmatprep.subr.mxu0 0.0
        %826 = vmatpush1.msra.mxu0 0.0
        %827 = vmatprep.subr.mxu0 0.0
        %828 = vmatpush1.msra.mxu0 0.0
        %829 = vmatprep.subr.mxu0 0.0
        %830 = vmatpush1.msra.mxu0 0.0
        %831 = vmatprep.subr.mxu0 0.0
        %832 = vmatpush1.msra.mxu0 0.0
        %833 = vmatprep.subr.mxu0 0.0
        %834 = vmatpush1.msra.mxu0 0.0
        %835 = vmatprep.subr.mxu0 0.0
        %836 = vmatpush1.msra.mxu0 0.0
        %837 = vmatprep.mubr.f32.mxu0 0.0
        %838 = vmatmul.mubr.f32.gmra.mrb[0].mxu0 %v762
        %v839 = vpop.f32.mrb[0].mxu0
        %v840 = vadd.f32 0.0, %v839
        %v841 = vpop.f32.mrb[0].mxu0
        %842 = vmatprep.mubr.f32.mxu0 0.0
        %843 = vmatmul.mubr.f32.gmra.mrb[0].mxu0 %v765
        %v844 = vpop.f32.mrb[0].mxu0
        %v845 = vadd.f32 0.0, %v844
        %v846 = vpop.f32.mrb[0].mxu0
        %847 = vmatprep.mubr.f32.mxu0 0.0
        %848 = vmatmul.mubr.f32.gmra.mrb[0].mxu0 %v768
        %v849 = vpop.f32.mrb[0].mxu0
        %v850 = vadd.f32 0.0, %v849
        %v851 = vpop.f32.mrb[0].mxu0
        %852 = vmatprep.mubr.f32.mxu0 0.0
        %853 = vmatmul.mubr.f32.gmra.mrb[0].mxu0 %v771
        %v854 = vpop.f32.mrb[0].mxu0
        %v855 = vadd.f32 0.0, %v854
        %v856 = vpop.f32.mrb[0].mxu0
        %857 = vdwg.mxu0
        %v858 = vmul.f32 %v604, %v840
        %v859 = vmul.f32 %v605, %v845
        %v860 = vmul.f32 %v606, %v850
        %v861 = vmul.f32 %v607, %v855
        %v862 = vmul.f32 %v330, %v228
        %v863 = vmul.f32 %v335, %v229
        %v864 = vmul.f32 %v340, %v230
        %v865 = vmul.f32 %v345, %v231
        %v866 = vmul.f32 %v330, %v232
        %v867 = vmul.f32 %v335, %v233
        %v868 = vmul.f32 %v340, %v234
        %v869 = vmul.f32 %v345, %v235
        %v870 = vmul.f32 %v330, %v236
        %v871 = vmul.f32 %v335, %v237
        %v872 = vmul.f32 %v340, %v238
        %v873 = vmul.f32 %v345, %v239
        %v874 = vmul.f32 %v330, %v240
        %v875 = vmul.f32 %v335, %v241
        %v876 = vmul.f32 %v340, %v242
        %v877 = vmul.f32 %v345, %v243
        %v878 = vlaneseq
        %v879 = vshrl.u32 %v878, 7
        %v880 = vsub.s32 0, %v879
        %v881 = vrot.slane %v222, %v880
        %882 = vmatprep.subr.mxu0 0.0
        %883 = vmatpush1.msra.mxu0 %v862
        %884 = vmatprep.subr.mxu0 0.0
        %885 = vmatpush1.msra.mxu0 %v863
        %886 = vmatprep.subr.mxu0 0.0
        %887 = vmatpush1.msra.mxu0 %v864
        %888 = vmatprep.subr.mxu0 0.0
        %889 = vmatpush1.msra.mxu0 %v865
        %890 = vmatprep.subr.mxu0 0.0
        %891 = vmatpush1.msra.mxu0 %v866
        %892 = vmatprep.subr.mxu0 0.0
        %893 = vmatpush1.msra.mxu0 %v867
        %894 = vmatprep.subr.mxu0 0.0
        %895 = vmatpush1.msra.mxu0 %v868
        %896 = vmatprep.subr.mxu0 0.0
        %897 = vmatpush1.msra.mxu0 %v869
        %898 = vmatprep.subr.mxu0 0.0
        %899 = vmatpush1.msra.mxu0 %v870
        %900 = vmatprep.subr.mxu0 0.0
        %901 = vmatpush1.msra.mxu0 %v871
        %902 = vmatprep.subr.mxu0 0.0
        %903 = vmatpush1.msra.mxu0 %v872
        %904 = vmatprep.subr.mxu0 0.0
        %905 = vmatpush1.msra.mxu0 %v873
        %906 = vmatprep.subr.mxu0 0.0
        %907 = vmatpush1.msra.mxu0 %v874
        %908 = vmatprep.subr.mxu0 0.0
        %909 = vmatpush1.msra.mxu0 %v875
        %910 = vmatprep.subr.mxu0 0.0
        %911 = vmatpush1.msra.mxu0 %v876
        %912 = vmatprep.subr.mxu0 0.0
        %913 = vmatpush1.msra.mxu0 %v877
        %914 = vmatprep.subr.mxu0 0.0
        %915 = vmatpush1.msra.mxu0 0.0
        %916 = vmatprep.subr.mxu0 0.0
        %917 = vmatpush1.msra.mxu0 0.0
        %918 = vmatprep.subr.mxu0 0.0
        %919 = vmatpush1.msra.mxu0 0.0
        %920 = vmatprep.subr.mxu0 0.0
        %921 = vmatpush1.msra.mxu0 0.0
        %922 = vmatprep.subr.mxu0 0.0
        %923 = vmatpush1.msra.mxu0 0.0
        %924 = vmatprep.subr.mxu0 0.0
        %925 = vmatpush1.msra.mxu0 0.0
        %926 = vmatprep.subr.mxu0 0.0
        %927 = vmatpush1.msra.mxu0 0.0
        %928 = vmatprep.subr.mxu0 0.0
        %929 = vmatpush1.msra.mxu0 0.0
        %930 = vmatprep.subr.mxu0 0.0
        %931 = vmatpush1.msra.mxu0 0.0
        %932 = vmatprep.subr.mxu0 0.0
        %933 = vmatpush1.msra.mxu0 0.0
        %934 = vmatprep.subr.mxu0 0.0
        %935 = vmatpush1.msra.mxu0 0.0
        %936 = vmatprep.subr.mxu0 0.0
        %937 = vmatpush1.msra.mxu0 0.0
        %938 = vmatprep.subr.mxu0 0.0
        %939 = vmatpush1.msra.mxu0 0.0
        %940 = vmatprep.subr.mxu0 0.0
        %941 = vmatpush1.msra.mxu0 0.0
        %942 = vmatprep.subr.mxu0 0.0
        %943 = vmatpush1.msra.mxu0 0.0
        %944 = vmatprep.subr.mxu0 0.0
        %945 = vmatpush1.msra.mxu0 0.0
        %946 = vmatprep.mubr.f32.mxu0 0.0
        %947 = vmatmul.mubr.f32.gmra.mrb[0].mxu0 %v858
        %v948 = vpop.f32.mrb[0].mxu0
        %v949 = vadd.f32 %v881, %v948
        %v950 = vpop.f32.mrb[0].mxu0
        %951 = vmatprep.mubr.f32.mxu0 0.0
        %952 = vmatmul.mubr.f32.gmra.mrb[0].mxu0 %v859
        %v953 = vpop.f32.mrb[0].mxu0
        %v954 = vadd.f32 %v881, %v953
        %v955 = vpop.f32.mrb[0].mxu0
        %956 = vmatprep.mubr.f32.mxu0 0.0
        %957 = vmatmul.mubr.f32.gmra.mrb[0].mxu0 %v860
        %v958 = vpop.f32.mrb[0].mxu0
        %v959 = vadd.f32 %v881, %v958
        %v960 = vpop.f32.mrb[0].mxu0
        %961 = vmatprep.mubr.f32.mxu0 0.0
        %962 = vmatmul.mubr.f32.gmra.mrb[0].mxu0 %v861
        %v963 = vpop.f32.mrb[0].mxu0
        %v964 = vadd.f32 %v881, %v963
        %v965 = vpop.f32.mrb[0].mxu0
        %966 = vdwg.mxu0
        %vm967 = vcmp.gt.f32.partialorder %v949, 0.0
        %vm968 = vcmp.gt.f32.partialorder %v954, 0.0
        %vm969 = vcmp.gt.f32.partialorder %v959, 0.0
        %vm970 = vcmp.gt.f32.partialorder %v964, 0.0
        %v971 = vmul.f32 %v949, 1.442695
        %v972 = vpow.pop %v971
        %v973 = vmul.f32 %v954, 1.442695
        %v974 = vpow.pop %v973
        %v975 = vmul.f32 %v959, 1.442695
        %v976 = vpow.pop %v975
        %v977 = vmul.f32 %v964, 1.442695
        %v978 = vpow.pop %v977
        %v979 = vsub.f32 %v972, 1.0
        %v980 = vsub.f32 %v974, 1.0
        %v981 = vsub.f32 %v976, 1.0
        %v982 = vsub.f32 %v978, 1.0
        %v983 = vsel %vm967, %v949, %v979
        %v984 = vsel %vm968, %v954, %v980
        %v985 = vsel %vm969, %v959, %v981
        %v986 = vsel %vm970, %v964, %v982
        %vm987 = vcmask 261120
        %v989 = vsel %vm987, %v983, 0
        %v992 = vsel %vm987, %v984, 0
        %v995 = vsel %vm987, %v985, 0
        %v998 = vsel %vm987, %v986, 0
        %1000 = vmatprep.subr.mxu0 0.0
        %1001 = vmatpush1.msra.mxu0 %v246
        %1002 = vmatprep.subr.mxu0 0.0
        %1003 = vmatpush1.msra.mxu0 %v247
        %1004 = vmatprep.subr.mxu0 0.0
        %1005 = vmatpush1.msra.mxu0 %v248
        %1006 = vmatprep.subr.mxu0 0.0
        %1007 = vmatpush1.msra.mxu0 %v249
        %1008 = vmatprep.subr.mxu0 0.0
        %1009 = vmatpush1.msra.mxu0 0.0
        %1010 = vmatprep.subr.mxu0 0.0
        %1011 = vmatpush1.msra.mxu0 0.0
        %1012 = vmatprep.subr.mxu0 0.0
        %1013 = vmatpush1.msra.mxu0 0.0
        %1014 = vmatprep.subr.mxu0 0.0
        %1015 = vmatpush1.msra.mxu0 0.0
        %1016 = vmatprep.subr.mxu0 0.0
        %1017 = vmatpush1.msra.mxu0 0.0
        %1018 = vmatprep.subr.mxu0 0.0
        %1019 = vmatpush1.msra.mxu0 0.0
        %1020 = vmatprep.subr.mxu0 0.0
        %1021 = vmatpush1.msra.mxu0 0.0
        %1022 = vmatprep.subr.mxu0 0.0
        %1023 = vmatpush1.msra.mxu0 0.0
        %1024 = vmatprep.subr.mxu0 0.0
        %1025 = vmatpush1.msra.mxu0 0.0
        %1026 = vmatprep.subr.mxu0 0.0
        %1027 = vmatpush1.msra.mxu0 0.0
        %1028 = vmatprep.subr.mxu0 0.0
        %1029 = vmatpush1.msra.mxu0 0.0
        %1030 = vmatprep.subr.mxu0 0.0
        %1031 = vmatpush1.msra.mxu0 0.0
        %1032 = vmatprep.subr.mxu0 0.0
        %1033 = vmatpush1.msra.mxu0 0.0
        %1034 = vmatprep.subr.mxu0 0.0
        %1035 = vmatpush1.msra.mxu0 0.0
        %1036 = vmatprep.subr.mxu0 0.0
        %1037 = vmatpush1.msra.mxu0 0.0
        %1038 = vmatprep.subr.mxu0 0.0
        %1039 = vmatpush1.msra.mxu0 0.0
        %1040 = vmatprep.subr.mxu0 0.0
        %1041 = vmatpush1.msra.mxu0 0.0
        %1042 = vmatprep.subr.mxu0 0.0
        %1043 = vmatpush1.msra.mxu0 0.0
        %1044 = vmatprep.subr.mxu0 0.0
        %1045 = vmatpush1.msra.mxu0 0.0
        %1046 = vmatprep.subr.mxu0 0.0
        %1047 = vmatpush1.msra.mxu0 0.0
        %1048 = vmatprep.subr.mxu0 0.0
        %1049 = vmatpush1.msra.mxu0 0.0
        %1050 = vmatprep.subr.mxu0 0.0
        %1051 = vmatpush1.msra.mxu0 0.0
        %1052 = vmatprep.subr.mxu0 0.0
        %1053 = vmatpush1.msra.mxu0 0.0
        %1054 = vmatprep.subr.mxu0 0.0
        %1055 = vmatpush1.msra.mxu0 0.0
        %1056 = vmatprep.subr.mxu0 0.0
        %1057 = vmatpush1.msra.mxu0 0.0
        %1058 = vmatprep.subr.mxu0 0.0
        %1059 = vmatpush1.msra.mxu0 0.0
        %1060 = vmatprep.subr.mxu0 0.0
        %1061 = vmatpush1.msra.mxu0 0.0
        %1062 = vmatprep.subr.mxu0 0.0
        %1063 = vmatpush1.msra.mxu0 0.0
        %1064 = vmatprep.mubr.f32.mxu0 0.0
        %1065 = vmatmul.mubr.f32.gmra.mrb[0].mxu0 %v989
        %v1066 = vpop.f32.mrb[0].mxu0
        %v1067 = vadd.f32 0.0, %v1066
        %v1068 = vpop.f32.mrb[0].mxu0
        %1069 = vmatprep.mubr.f32.mxu0 0.0
        %1070 = vmatmul.mubr.f32.gmra.mrb[0].mxu0 %v992
        %v1071 = vpop.f32.mrb[0].mxu0
        %v1072 = vadd.f32 0.0, %v1071
        %v1073 = vpop.f32.mrb[0].mxu0
        %1074 = vmatprep.mubr.f32.mxu0 0.0
        %1075 = vmatmul.mubr.f32.gmra.mrb[0].mxu0 %v995
        %v1076 = vpop.f32.mrb[0].mxu0
        %v1077 = vadd.f32 0.0, %v1076
        %v1078 = vpop.f32.mrb[0].mxu0
        %1079 = vmatprep.mubr.f32.mxu0 0.0
        %1080 = vmatmul.mubr.f32.gmra.mrb[0].mxu0 %v998
        %v1081 = vpop.f32.mrb[0].mxu0
        %v1082 = vadd.f32 0.0, %v1081
        %v1083 = vpop.f32.mrb[0].mxu0
        %1084 = vdwg.mxu0
        %1086 = vset.pattern.permute.xlu0 4
        %1087 = vperm.xlu0 %1086, %v1067
        %v1088 = vpop.permute.xlu0 %1087
        %1091 = vset.pattern.permute.xlu0 4
        %1092 = vperm.xlu0 %1091, %v1072
        %v1093 = vpop.permute.xlu0 %1092
        %1096 = vset.pattern.permute.xlu0 4
        %1097 = vperm.xlu0 %1096, %v1077
        %v1098 = vpop.permute.xlu0 %1097
        %1101 = vset.pattern.permute.xlu0 4
        %1102 = vperm.xlu0 %1101, %v1082
        %v1103 = vpop.permute.xlu0 %1102
        %v1105 = vmul.f32 %v1088, %v224
        %v1106 = vmul.f32 %v1093, %v225
        %v1107 = vmul.f32 %v1098, %v226
        %v1108 = vmul.f32 %v1103, %v227
        %v1109 = vsel %vm987, %v1105, 0.0
        %v1110 = vsel %vm987, %v1106, 0.0
        %v1111 = vadd.f32 %v1109, %v1110
        %v1112 = vsel %vm987, %v1107, 0.0
        %v1113 = vadd.f32 %v1111, %v1112
        %v1114 = vsel %vm987, %v1108, 0.0
        %v1115 = vadd.f32 %v1113, %v1114
        %v1116 = vrot.slane %v1115, 4
        %v1117 = vadd.f32 %v1115, %v1116
        %v1118 = vrot.slane %v1117, 2
        %v1119 = vadd.f32 %v1117, %v1118
        %v1120 = vrot.slane %v1119, 1
        %v1121 = vadd.f32 %v1119, %v1120
        %1122 = vset.pattern.permute.xlu0 5
        %1123 = vperm.xlu0 %1122, %v1067
        %v1124 = vpop.permute.xlu0 %1123
        %1126 = vset.pattern.permute.xlu0 5
        %1127 = vperm.xlu0 %1126, %v1072
        %v1128 = vpop.permute.xlu0 %1127
        %1130 = vset.pattern.permute.xlu0 5
        %1131 = vperm.xlu0 %1130, %v1077
        %v1132 = vpop.permute.xlu0 %1131
        %1134 = vset.pattern.permute.xlu0 5
        %1135 = vperm.xlu0 %1134, %v1082
        %v1136 = vpop.permute.xlu0 %1135
        %v1138 = vadd.f32 %v1124, %v1121
        %v1139 = vadd.f32 %v1128, %v1121
        %v1140 = vadd.f32 %v1132, %v1121
        %v1141 = vadd.f32 %v1136, %v1121
        %vm1142 = vcmp.gt.f32.partialorder %v1138, 0.0
        %vm1143 = vcmp.gt.f32.partialorder %v1139, 0.0
        %vm1144 = vcmp.gt.f32.partialorder %v1140, 0.0
        %vm1145 = vcmp.gt.f32.partialorder %v1141, 0.0
        %v1146 = vmul.f32 %v1138, 0.2
        %v1147 = vmul.f32 %v1139, 0.2
        %v1148 = vmul.f32 %v1140, 0.2
        %v1149 = vmul.f32 %v1141, 0.2
        %v1150 = vsel %vm1142, %v1138, %v1146
        %v1151 = vsel %vm1143, %v1139, %v1147
        %v1152 = vsel %vm1144, %v1140, %v1148
        %v1153 = vsel %vm1145, %v1141, %v1149
        %v1154 = vsel %vm987, %v1150, -inf
        %1155 = vmax.xlane.f32.xlu0 %v1154
        %v1156 = vpop.xlane.xlu0 %1155
        %v1157 = vsel %vm987, %v1151, -inf
        %1158 = vmax.xlane.f32.xlu0 %v1157
        %v1159 = vpop.xlane.xlu0 %1158
        %v1160 = vsel %vm987, %v1152, -inf
        %1161 = vmax.xlane.f32.xlu0 %v1160
        %v1162 = vpop.xlane.xlu0 %1161
        %v1163 = vsel %vm987, %v1153, -inf
        %1164 = vmax.xlane.f32.xlu0 %v1163
        %v1165 = vpop.xlane.xlu0 %1164
        %v1166 = vsub.f32 %v1150, %v1156
        %v1167 = vsub.f32 %v1151, %v1159
        %v1168 = vsub.f32 %v1152, %v1162
        %v1169 = vsub.f32 %v1153, %v1165
        %v1170 = vmul.f32 %v1166, 1.442695
        %v1171 = vpow.pop %v1170
        %v1172 = vmul.f32 %v1167, 1.442695
        %v1173 = vpow.pop %v1172
        %v1174 = vmul.f32 %v1168, 1.442695
        %v1175 = vpow.pop %v1174
        %v1176 = vmul.f32 %v1169, 1.442695
        %v1177 = vpow.pop %v1176
        %v1178 = vmul.f32 %v1171, %v213
        %v1179 = vmul.f32 %v1173, %v214
        %v1180 = vmul.f32 %v1175, %v215
        %v1181 = vmul.f32 %v1177, %v216
        %v1182 = vsel %vm987, %v1178, 0.0
        %1183 = vadd.xlane.f32.xlu0 %v1182
        %v1184 = vpop.xlane.xlu0 %1183
        %v1185 = vsel %vm987, %v1179, 0.0
        %1186 = vadd.xlane.f32.xlu0 %v1185
        %v1187 = vpop.xlane.xlu0 %1186
        %v1188 = vsel %vm987, %v1180, 0.0
        %1189 = vadd.xlane.f32.xlu0 %v1188
        %v1190 = vpop.xlane.xlu0 %1189
        %v1191 = vsel %vm987, %v1181, 0.0
        %1192 = vadd.xlane.f32.xlu0 %v1191
        %v1193 = vpop.xlane.xlu0 %1192
        %v1194 = vmul.f32 %v1171, %v217
        %v1195 = vmul.f32 %v1173, %v218
        %v1196 = vmul.f32 %v1175, %v219
        %v1197 = vmul.f32 %v1177, %v220
        %v1199 = vsel %vm987, %v1194, 0
        %v1202 = vsel %vm987, %v1195, 0
        %v1205 = vsel %vm987, %v1196, 0
        %v1208 = vsel %vm987, %v1197, 0
        %1210 = vmatprep.subr.mxu0 0.0
        %1211 = vmatpush1.msra.mxu0 %v1067
        %1212 = vmatprep.subr.mxu0 0.0
        %1213 = vmatpush1.msra.mxu0 %v1072
        %1214 = vmatprep.subr.mxu0 0.0
        %1215 = vmatpush1.msra.mxu0 %v1077
        %1216 = vmatprep.subr.mxu0 0.0
        %1217 = vmatpush1.msra.mxu0 %v1082
        %1218 = vmatprep.subr.mxu0 0.0
        %1219 = vmatpush1.msra.mxu0 0.0
        %1220 = vmatprep.subr.mxu0 0.0
        %1221 = vmatpush1.msra.mxu0 0.0
        %1222 = vmatprep.subr.mxu0 0.0
        %1223 = vmatpush1.msra.mxu0 0.0
        %1224 = vmatprep.subr.mxu0 0.0
        %1225 = vmatpush1.msra.mxu0 0.0
        %1226 = vmatprep.subr.mxu0 0.0
        %1227 = vmatpush1.msra.mxu0 0.0
        %1228 = vmatprep.subr.mxu0 0.0
        %1229 = vmatpush1.msra.mxu0 0.0
        %1230 = vmatprep.subr.mxu0 0.0
        %1231 = vmatpush1.msra.mxu0 0.0
        %1232 = vmatprep.subr.mxu0 0.0
        %1233 = vmatpush1.msra.mxu0 0.0
        %1234 = vmatprep.subr.mxu0 0.0
        %1235 = vmatpush1.msra.mxu0 0.0
        %1236 = vmatprep.subr.mxu0 0.0
        %1237 = vmatpush1.msra.mxu0 0.0
        %1238 = vmatprep.subr.mxu0 0.0
        %1239 = vmatpush1.msra.mxu0 0.0
        %1240 = vmatprep.subr.mxu0 0.0
        %1241 = vmatpush1.msra.mxu0 0.0
        %1242 = vmatprep.subr.mxu0 0.0
        %1243 = vmatpush1.msra.mxu0 0.0
        %1244 = vmatprep.subr.mxu0 0.0
        %1245 = vmatpush1.msra.mxu0 0.0
        %1246 = vmatprep.subr.mxu0 0.0
        %1247 = vmatpush1.msra.mxu0 0.0
        %1248 = vmatprep.subr.mxu0 0.0
        %1249 = vmatpush1.msra.mxu0 0.0
        %1250 = vmatprep.subr.mxu0 0.0
        %1251 = vmatpush1.msra.mxu0 0.0
        %1252 = vmatprep.subr.mxu0 0.0
        %1253 = vmatpush1.msra.mxu0 0.0
        %1254 = vmatprep.subr.mxu0 0.0
        %1255 = vmatpush1.msra.mxu0 0.0
        %1256 = vmatprep.subr.mxu0 0.0
        %1257 = vmatpush1.msra.mxu0 0.0
        %1258 = vmatprep.subr.mxu0 0.0
        %1259 = vmatpush1.msra.mxu0 0.0
        %1260 = vmatprep.subr.mxu0 0.0
        %1261 = vmatpush1.msra.mxu0 0.0
        %1262 = vmatprep.subr.mxu0 0.0
        %1263 = vmatpush1.msra.mxu0 0.0
        %1264 = vmatprep.subr.mxu0 0.0
        %1265 = vmatpush1.msra.mxu0 0.0
        %1266 = vmatprep.subr.mxu0 0.0
        %1267 = vmatpush1.msra.mxu0 0.0
        %1268 = vmatprep.subr.mxu0 0.0
        %1269 = vmatpush1.msra.mxu0 0.0
        %1270 = vmatprep.subr.mxu0 0.0
        %1271 = vmatpush1.msra.mxu0 0.0
        %1272 = vmatprep.subr.mxu0 0.0
        %1273 = vmatpush1.msra.mxu0 0.0
        %1274 = vmatprep.mubr.f32.mxu0 0.0
        %1275 = vmatmul.mubr.f32.gmra.mrb[0].mxu0 %v1199
        %v1276 = vpop.f32.mrb[0].mxu0
        %v1277 = vadd.f32 0.0, %v1276
        %v1278 = vpop.f32.mrb[0].mxu0
        %1279 = vmatprep.mubr.f32.mxu0 0.0
        %1280 = vmatmul.mubr.f32.gmra.mrb[0].mxu0 %v1202
        %v1281 = vpop.f32.mrb[0].mxu0
        %v1282 = vadd.f32 0.0, %v1281
        %v1283 = vpop.f32.mrb[0].mxu0
        %1284 = vmatprep.mubr.f32.mxu0 0.0
        %1285 = vmatmul.mubr.f32.gmra.mrb[0].mxu0 %v1205
        %v1286 = vpop.f32.mrb[0].mxu0
        %v1287 = vadd.f32 0.0, %v1286
        %v1288 = vpop.f32.mrb[0].mxu0
        %1289 = vmatprep.mubr.f32.mxu0 0.0
        %1290 = vmatmul.mubr.f32.gmra.mrb[0].mxu0 %v1208
        %v1291 = vpop.f32.mrb[0].mxu0
        %v1292 = vadd.f32 0.0, %v1291
        %v1293 = vpop.f32.mrb[0].mxu0
        %1294 = vdwg.mxu0
        %v1295 = vrcp.pop %v1184
        %v1296 = vrcp.pop %v1187
        %v1297 = vrcp.pop %v1190
        %v1298 = vrcp.pop %v1193
        %v1299 = vmul.f32 %v1277, %v1295
        %v1300 = vmul.f32 %v1282, %v1296
        %v1301 = vmul.f32 %v1287, %v1297
        %v1302 = vmul.f32 %v1292, %v1298
        %v1303 = vlaneseq
        %v1304 = vshrl.u32 %v1303, 7
        %v1305 = vsub.s32 0, %v1304
        %v1306 = vrot.slane %v223, %v1305
        %v1307 = vadd.f32 %v1299, %v1306
        %v1308 = vadd.f32 %v1300, %v1306
        %v1309 = vadd.f32 %v1301, %v1306
        %v1310 = vadd.f32 %v1302, %v1306
        %1311 = vst [vmem:[%s203] sm:$0xff] %v1307
        %1312 = vst [vmem:[%s203 + $0x8] sm:$0xff] %v1308
        %1313 = vst [vmem:[%s203 + $0x10] sm:$0xff] %v1309
        %1314 = vst [vmem:[%s203 + $0x18] sm:$0xff] %v1310
        %s1315 = sand.u32 %s101, 1
        %s1316 = scalar_lea.sflag [#allocation4], %s1315
        %s1317 = sand.u32 %s101, 1
        %s1318 = smul.addr %s1317, 32
        %s1319 = scalar_lea.vmem [#allocation5], %s1318
        // Predicated region
        $region37: #{tpu_custom_call.1} parent=31 // pred_check
          %p1320 = pneg %p111
        $region38: #{tpu_custom_call.1} parent=31 // pred_check_branch
          %1322 = sbr.rel (%p1320) target = $region40
        $region39: #{tpu_custom_call.1} parent=31 // pred_region
          %s1324 = ssub.s32 512, 512
          %1325 = vsyncadd %s1316, %s1324
          %s1326 = smul.addr %s20, 4
          %s1327 = smul.addr %s1326, 128
          %s1328 = scalar_lea.hbm %s3, %s1327
          %s1329 = sshll.u32 %s1319, 4
          %s1330 = int_to_ptr.vmem [resolvable:$true] %s1329
          %1335 = dma.vmem_to_hbm [thread:$0]  %s1330, 512, %s1328, %s1316, 128, 128, 8
        $region40: #{tpu_custom_call.1} parent=31 // pred_fallthru
          _
      $region32: #{tpu_custom_call.1} parent=5 // pred_fallthru
        _
      %p1336 = scmp.le.s32.totalorder 2, %s15
      // Predicated region
      $region41: #{tpu_custom_call.1} parent=5 // pred_check
        %p1337 = pneg %p1336
      $region42: #{tpu_custom_call.1} parent=5 // pred_check_branch
        %1339 = sbr.rel (%p1337) target = $region44
      $region43: #{tpu_custom_call.1} parent=5 // pred_region
        %s1340 = ssub.s32 %s15, 2
        // Predicated region
        $region45: #{tpu_custom_call.1} parent=43 // pred_check
          %p1341 = pneg %p117
        $region46: #{tpu_custom_call.1} parent=43 // pred_check_branch
          %1343 = sbr.rel (%p1341) target = $region48
        $region47: #{tpu_custom_call.1} parent=43 // pred_region
          %s1344 = sand.u32 %s102, 1
          %s1345 = scalar_lea.sflag [#allocation4], %s1344
          %s1346 = sand.u32 %s102, 1
          %s1347 = smul.addr %s1346, 32
          %s1348 = scalar_lea.vmem [#allocation5], %s1347
          %1349 = dma.done %s1345, 512
        $region48: #{tpu_custom_call.1} parent=43 // pred_fallthru
          _
      $region44: #{tpu_custom_call.1} parent=5 // pred_fallthru
        _
    $region6: #{tpu_custom_call.1} parent=1 // loop_footer
      %s19 = sadd.s32 1, %s15
    $region7: #{tpu_custom_call.1} parent=1 // loop_footer_branch
      %14 = sbr.rel target = $region3
    $region8: #{tpu_custom_call.1} parent=1 // loop_exit
      _
    %1350 = vsyncpa [#allocation3], 1
    %s1351 = scalar_lea.sflag [#allocation3], 1
    %1352 = vsyncpa %s1351, 1
    %1353 = vsyncpa [#allocation4], 1
    %s1354 = scalar_lea.sflag [#allocation4], 1
    %1355 = vsyncpa %s1354, 1

</llo_original>
